<compile_context>
chip_gen: v5e
topology: v5e:2x2
jax: 0.10.0
libtpu: 0.0.40
codegen_flags: <defaults>
</compile_context>

<pallas_src>
import math
import functools

import jax
import jax.numpy as jnp
from jax.experimental import pallas as pl
from jax.experimental.pallas import tpu as pltpu  # noqa: F401  (TPU backend)

# ----------------------------- model config ---------------------------------
B = 2            # batch
S = 8            # sequence length
D_MODEL = 32     # layer.size
N_HEADS = 4
D_K = D_MODEL // N_HEADS
D_FF = 64
N_LAYERS = 2
LN_EPS = 1e-5    # nn.LayerNorm default eps
MAX_LEN = 64


# ------------------------------ fused kernel ---------------------------------
def _layernorm(x, g, b):
    mean = jnp.mean(x, axis=-1, keepdims=True)
    var = jnp.mean((x - mean) ** 2, axis=-1, keepdims=True)
    return (x - mean) * jax.lax.rsqrt(var + LN_EPS) * g + b


def _encoder_kernel(x_ref, mask_ref, pe_ref,
                    ln1g_ref, ln1b_ref, wqkv_ref, bqkv_ref, wo_ref, bo_ref,
                    ln2g_ref, ln2b_ref, w1_ref, b1_ref, w2_ref, b2_ref,
                    nfg_ref, nfb_ref, o_ref):
    Bb, Ss, Dd = x_ref.shape
    M = Bb * Ss
    scale = 1.0 / math.sqrt(D_K)

    # positional encoding folded into the fused kernel (broadcast over batch)
    x = (x_ref[...] + pe_ref[...]).reshape(M, Dd)

    # hoist the mask broadcast once: (B,1,S) -> bool (B,S,S), same for all
    # layers and heads
    mask_keep = jnp.broadcast_to(mask_ref[...], (Bb, Ss, Ss)) != 0.0

    for l in range(N_LAYERS):  # unrolled: N_LAYERS is small & static
        # ---- sublayer 0: pre-norm multi-head self-attention + residual ----
        xn = _layernorm(x, ln1g_ref[l], ln1b_ref[l])
        qkv = (jnp.dot(xn, wqkv_ref[l], preferred_element_type=jnp.float32)
               + bqkv_ref[l])                              # (M, 3D)
        q3 = qkv[:, 0 * Dd:1 * Dd].reshape(Bb, Ss, Dd)
        k3 = qkv[:, 1 * Dd:2 * Dd].reshape(Bb, Ss, Dd)
        v3 = qkv[:, 2 * Dd:3 * Dd].reshape(Bb, Ss, Dd)

        heads = []
        for h in range(N_HEADS):                           # static lane slices
            sl = slice(h * D_K, (h + 1) * D_K)
            qh = q3[:, :, sl]                              # (B, S, Dk)
            kh = k3[:, :, sl]
            vh = v3[:, :, sl]
            s = jnp.einsum('bqd,bkd->bqk', qh, kh,
                           preferred_element_type=jnp.float32) * scale
            s = jnp.where(mask_keep, s, -1e9)
            s = s - jnp.max(s, axis=-1, keepdims=True)
            p = jnp.exp(s)
            p = p * pl.reciprocal(jnp.sum(p, axis=-1, keepdims=True),
                                  approx=True)
            heads.append(jnp.einsum('bqk,bkd->bqd', p, vh,
                                    preferred_element_type=jnp.float32))
        # lane-dense merge of heads (no JAX-side transpose / narrow stores)
        attn = jnp.concatenate(heads, axis=-1).reshape(M, Dd)
        attn = (jnp.dot(attn, wo_ref[l], preferred_element_type=jnp.float32)
                + bo_ref[l])
        x = x + attn                                       # dropout = identity

        # ---- sublayer 1: pre-norm position-wise FFN + residual ----
        xn = _layernorm(x, ln2g_ref[l], ln2b_ref[l])
        h1 = jnp.maximum(
            jnp.dot(xn, w1_ref[l], preferred_element_type=jnp.float32)
            + b1_ref[l], 0.0)
        ff = (jnp.dot(h1, w2_ref[l], preferred_element_type=jnp.float32)
              + b2_ref[l])
        x = x + ff                                         # dropout = identity

    # final LayerNorm
    o_ref[...] = _layernorm(x, nfg_ref[...], nfb_ref[...]).reshape(Bb, Ss, Dd)


# ------------------------------ wrapper --------------------------------------
@functools.partial(jax.jit)
def transformer_encoder_forward(params, x, mask):
    # mask: (B, S) of {0,1};  mask.unsqueeze(1) -> (B, 1, S)
    Bb, Ss, Dd = x.shape
    mask3 = mask[:, None, :].astype(jnp.float32)
    pe = params["pe"][:, :Ss, :]
    return pl.pallas_call(
        _encoder_kernel,
        out_shape=jax.ShapeDtypeStruct((Bb, Ss, Dd), jnp.float32),
        # default (whole-array) BlockSpecs: every operand lives in VMEM for the
        # single kernel invocation — no grid, no per-step DMA.
    )(x, mask3, pe,
      params["ln1_g"], params["ln1_b"],
      params["wqkv"], params["bqkv"],
      params["wo"], params["bo"],
      params["ln2_g"], params["ln2_b"],
      params["w1"], params["b1"],
      params["w2"], params["b2"],
      params["norm_g"], params["norm_b"])


# ------------------------------ params / PE -----------------------------------
def sinusoidal_pe(max_len, d_model):
    position = jnp.arange(max_len, dtype=jnp.float32)[:, None]
    div_term = jnp.exp(
        jnp.arange(0, d_model, 2, dtype=jnp.float32)
        * (-math.log(10000.0) / d_model))
    pe = jnp.zeros((max_len, d_model), dtype=jnp.float32)
    pe = pe.at[:, 0::2].set(jnp.sin(position * div_term))
    pe = pe.at[:, 1::2].set(jnp.cos(position * div_term))
    return pe[None, :, :]  # (1, max_len, d_model)


def init_params(key):
    def dense(k, fan_in, fan_out):
        return 0.02 * jax.random.normal(k, (fan_in, fan_out), dtype=jnp.float32)

    wqkv_l, wo_l, w1_l, w2_l = [], [], [], []
    for l in range(N_LAYERS):
        ks = jax.random.split(jax.random.fold_in(key, l), 6)
        # fused Q/K/V projection weight: (D, 3D)
        wqkv_l.append(jnp.concatenate(
            [dense(ks[0], D_MODEL, D_MODEL),
             dense(ks[1], D_MODEL, D_MODEL),
             dense(ks[2], D_MODEL, D_MODEL)], axis=1))
        wo_l.append(dense(ks[3], D_MODEL, D_MODEL))
        w1_l.append(dense(ks[4], D_MODEL, D_FF))
        w2_l.append(dense(ks[5], D_FF, D_MODEL))

    L = N_LAYERS
    return dict(
        ln1_g=jnp.ones((L, 1, D_MODEL), jnp.float32),
        ln1_b=jnp.zeros((L, 1, D_MODEL), jnp.float32),
        wqkv=jnp.stack(wqkv_l),
        bqkv=jnp.zeros((L, 1, 3 * D_MODEL), jnp.float32),
        wo=jnp.stack(wo_l),
        bo=jnp.zeros((L, 1, D_MODEL), jnp.float32),
        ln2_g=jnp.ones((L, 1, D_MODEL), jnp.float32),
        ln2_b=jnp.zeros((L, 1, D_MODEL), jnp.float32),
        w1=jnp.stack(w1_l),
        b1=jnp.zeros((L, 1, D_FF), jnp.float32),
        w2=jnp.stack(w2_l),
        b2=jnp.zeros((L, 1, D_MODEL), jnp.float32),
        norm_g=jnp.ones((1, D_MODEL), jnp.float32),
        norm_b=jnp.zeros((1, D_MODEL), jnp.float32),
        pe=sinusoidal_pe(MAX_LEN, D_MODEL),
    )


# ----------------------------------- main -------------------------------------
if __name__ == "__main__":
    key = jax.random.PRNGKey(0)
    kx, kp = jax.random.split(key)

    params = init_params(kp)
    x = jax.random.normal(kx, (B, S, D_MODEL), dtype=jnp.float32)
    mask = jnp.ones((B, S), dtype=jnp.float32)
    mask = mask.at[1, 6:].set(0.0)  # pad out last 2 positions of batch 1

    out = transformer_encoder_forward(params, x, mask)
    jax.block_until_ready(out)
    assert out.shape == (B, S, D_MODEL) and out.dtype == jnp.float32
    assert bool(jnp.all(jnp.isfinite(out)))
    print("KERNEL_OK")
</pallas_src>

<mosaic_0001>
module attributes {stable_mosaic.version = 11 : i64} {
  func.func @_encoder_kernel(%arg0: memref<2x8x32xf32, #tpu.memory_space<vmem>>, %arg1: memref<2x1x8xf32, #tpu.memory_space<vmem>>, %arg2: memref<1x8x32xf32, #tpu.memory_space<vmem>>, %arg3: memref<2x1x32xf32, #tpu.memory_space<vmem>>, %arg4: memref<2x1x32xf32, #tpu.memory_space<vmem>>, %arg5: memref<2x32x96xf32, #tpu.memory_space<vmem>>, %arg6: memref<2x1x96xf32, #tpu.memory_space<vmem>>, %arg7: memref<2x32x32xf32, #tpu.memory_space<vmem>>, %arg8: memref<2x1x32xf32, #tpu.memory_space<vmem>>, %arg9: memref<2x1x32xf32, #tpu.memory_space<vmem>>, %arg10: memref<2x1x32xf32, #tpu.memory_space<vmem>>, %arg11: memref<2x32x64xf32, #tpu.memory_space<vmem>>, %arg12: memref<2x1x64xf32, #tpu.memory_space<vmem>>, %arg13: memref<2x64x32xf32, #tpu.memory_space<vmem>>, %arg14: memref<2x1x32xf32, #tpu.memory_space<vmem>>, %arg15: memref<1x32xf32, #tpu.memory_space<vmem>>, %arg16: memref<1x32xf32, #tpu.memory_space<vmem>>, %arg17: memref<2x8x32xf32, #tpu.memory_space<vmem>>) attributes {dimension_semantics = [], scalar_prefetch = 0 : i64, scratch_operands = 0 : i64, tpu.core_type = #tpu.core_type<tc>} {
    %c0 = arith.constant 0 : index
    %c0_0 = arith.constant 0 : index
    %c0_1 = arith.constant 0 : index
    %0 = vector.load %arg0[%c0, %c0_0, %c0_1] : memref<2x8x32xf32, #tpu.memory_space<vmem>>, vector<2x8x32xf32>
    %c0_2 = arith.constant 0 : index
    %c0_3 = arith.constant 0 : index
    %c0_4 = arith.constant 0 : index
    %1 = vector.load %arg2[%c0_2, %c0_3, %c0_4] : memref<1x8x32xf32, #tpu.memory_space<vmem>>, vector<1x8x32xf32>
    %2 = vector.broadcast %1 : vector<1x8x32xf32> to vector<2x8x32xf32>
    %3 = arith.addf %0, %2 : vector<2x8x32xf32>
    %4 = vector.shape_cast %3 : vector<2x8x32xf32> to vector<16x32xf32>
    %c0_5 = arith.constant 0 : index
    %c0_6 = arith.constant 0 : index
    %c0_7 = arith.constant 0 : index
    %5 = vector.load %arg1[%c0_5, %c0_6, %c0_7] : memref<2x1x8xf32, #tpu.memory_space<vmem>>, vector<2x1x8xf32>
    %6 = vector.shape_cast %5 : vector<2x1x8xf32> to vector<2x1x8xf32>
    %7 = vector.broadcast %6 : vector<2x1x8xf32> to vector<2x8x8xf32>
    %cst = arith.constant 0.000000e+00 : f32
    %8 = vector.broadcast %cst : f32 to vector<2x8x8xf32>
    %9 = arith.cmpf one, %7, %8 : vector<2x8x8xf32>
    %c0_8 = arith.constant 0 : index
    %c0_9 = arith.constant 0 : index
    %c0_10 = arith.constant 0 : index
    %10 = vector.load %arg3[%c0_8, %c0_9, %c0_10] : memref<2x1x32xf32, #tpu.memory_space<vmem>>, vector<1x1x32xf32>
    %11 = vector.shape_cast %10 : vector<1x1x32xf32> to vector<1x32xf32>
    %c0_11 = arith.constant 0 : index
    %c0_12 = arith.constant 0 : index
    %c0_13 = arith.constant 0 : index
    %12 = vector.load %arg4[%c0_11, %c0_12, %c0_13] : memref<2x1x32xf32, #tpu.memory_space<vmem>>, vector<1x1x32xf32>
    %13 = vector.shape_cast %12 : vector<1x1x32xf32> to vector<1x32xf32>
    %cst_14 = arith.constant dense<0.000000e+00> : vector<16xf32>
    %14 = vector.multi_reduction <add>, %4, %cst_14 [1] : vector<16x32xf32> to vector<16xf32>
    %15 = vector.shape_cast %14 : vector<16xf32> to vector<16x1xf32>
    %cst_15 = arith.constant 3.200000e+01 : f32
    %16 = vector.broadcast %cst_15 : f32 to vector<16x1xf32>
    %17 = arith.divf %15, %16 : vector<16x1xf32>
    %18 = vector.broadcast %17 : vector<16x1xf32> to vector<16x32xf32>
    %19 = arith.subf %4, %18 : vector<16x32xf32>
    %20 = arith.mulf %19, %19 : vector<16x32xf32>
    %cst_16 = arith.constant dense<0.000000e+00> : vector<16xf32>
    %21 = vector.multi_reduction <add>, %20, %cst_16 [1] : vector<16x32xf32> to vector<16xf32>
    %22 = vector.shape_cast %21 : vector<16xf32> to vector<16x1xf32>
    %cst_17 = arith.constant 3.200000e+01 : f32
    %23 = vector.broadcast %cst_17 : f32 to vector<16x1xf32>
    %24 = arith.divf %22, %23 : vector<16x1xf32>
    %25 = vector.broadcast %17 : vector<16x1xf32> to vector<16x32xf32>
    %26 = arith.subf %4, %25 : vector<16x32xf32>
    %cst_18 = arith.constant 9.99999974E-6 : f32
    %27 = vector.broadcast %cst_18 : f32 to vector<16x1xf32>
    %28 = arith.addf %24, %27 : vector<16x1xf32>
    %29 = math.rsqrt %28 : vector<16x1xf32>
    %30 = vector.broadcast %29 : vector<16x1xf32> to vector<16x32xf32>
    %31 = arith.mulf %26, %30 : vector<16x32xf32>
    %32 = vector.broadcast %11 : vector<1x32xf32> to vector<16x32xf32>
    %33 = arith.mulf %31, %32 : vector<16x32xf32>
    %34 = vector.broadcast %13 : vector<1x32xf32> to vector<16x32xf32>
    %35 = arith.addf %33, %34 : vector<16x32xf32>
    %c0_19 = arith.constant 0 : index
    %c0_20 = arith.constant 0 : index
    %c0_21 = arith.constant 0 : index
    %36 = vector.load %arg5[%c0_19, %c0_20, %c0_21] : memref<2x32x96xf32, #tpu.memory_space<vmem>>, vector<1x32x96xf32>
    %37 = vector.shape_cast %36 : vector<1x32x96xf32> to vector<32x96xf32>
    %cst_22 = arith.constant dense<0.000000e+00> : vector<16x96xf32>
    %38 = tpu.matmul %35, %37, %cst_22 {dimension_numbers = #tpu.dot_dimension_numbers<[1], [0], [0], [1], [0, 0, 1, 1], [], []>} : vector<16x32xf32>, vector<32x96xf32>, vector<16x96xf32> -> vector<16x96xf32>
    %c0_23 = arith.constant 0 : index
    %c0_24 = arith.constant 0 : index
    %c0_25 = arith.constant 0 : index
    %39 = vector.load %arg6[%c0_23, %c0_24, %c0_25] : memref<2x1x96xf32, #tpu.memory_space<vmem>>, vector<1x1x96xf32>
    %40 = vector.shape_cast %39 : vector<1x1x96xf32> to vector<1x96xf32>
    %41 = vector.broadcast %40 : vector<1x96xf32> to vector<16x96xf32>
    %42 = arith.addf %38, %41 : vector<16x96xf32>
    %43 = vector.extract_strided_slice %42 {offsets = [0, 0], sizes = [16, 32], strides = [1, 1]} : vector<16x96xf32> to vector<16x32xf32>
    %44 = vector.shape_cast %43 : vector<16x32xf32> to vector<2x8x32xf32>
    %45 = vector.extract_strided_slice %42 {offsets = [0, 32], sizes = [16, 32], strides = [1, 1]} : vector<16x96xf32> to vector<16x32xf32>
    %46 = vector.shape_cast %45 : vector<16x32xf32> to vector<2x8x32xf32>
    %47 = vector.extract_strided_slice %42 {offsets = [0, 64], sizes = [16, 32], strides = [1, 1]} : vector<16x96xf32> to vector<16x32xf32>
    %48 = vector.shape_cast %47 : vector<16x32xf32> to vector<2x8x32xf32>
    %49 = vector.extract_strided_slice %44 {offsets = [0, 0, 0], sizes = [2, 8, 8], strides = [1, 1, 1]} : vector<2x8x32xf32> to vector<2x8x8xf32>
    %50 = vector.extract_strided_slice %46 {offsets = [0, 0, 0], sizes = [2, 8, 8], strides = [1, 1, 1]} : vector<2x8x32xf32> to vector<2x8x8xf32>
    %51 = vector.extract_strided_slice %48 {offsets = [0, 0, 0], sizes = [2, 8, 8], strides = [1, 1, 1]} : vector<2x8x32xf32> to vector<2x8x8xf32>
    "tpu.trace_start"() <{level = 10 : i32, message = "bqd,bkd->bqk"}> : () -> ()
    %cst_26 = arith.constant dense<0.000000e+00> : vector<2x8x8xf32>
    %52 = tpu.matmul %49, %50, %cst_26 {dimension_numbers = #tpu.dot_dimension_numbers<[2], [2], [1], [1], [0, 0, 0, 1, 1, 1], [0], [0]>} : vector<2x8x8xf32>, vector<2x8x8xf32>, vector<2x8x8xf32> -> vector<2x8x8xf32>
    "tpu.trace_stop"() : () -> ()
    %cst_27 = arith.constant 0.353553385 : f32
    %53 = vector.broadcast %cst_27 : f32 to vector<2x8x8xf32>
    %54 = arith.mulf %52, %53 : vector<2x8x8xf32>
    %cst_28 = arith.constant -1.000000e+09 : f32
    %55 = vector.broadcast %cst_28 : f32 to vector<2x8x8xf32>
    %56 = arith.select %9, %54, %55 : vector<2x8x8xi1>, vector<2x8x8xf32>
    %cst_29 = arith.constant dense<0xFF800000> : vector<2x8xf32>
    %57 = vector.multi_reduction <maximumf>, %56, %cst_29 [2] : vector<2x8x8xf32> to vector<2x8xf32>
    %58 = vector.shape_cast %57 : vector<2x8xf32> to vector<2x8x1xf32>
    %59 = vector.broadcast %58 : vector<2x8x1xf32> to vector<2x8x8xf32>
    %60 = arith.subf %56, %59 : vector<2x8x8xf32>
    %61 = math.exp %60 : vector<2x8x8xf32>
    %cst_30 = arith.constant dense<0.000000e+00> : vector<2x8xf32>
    %62 = vector.multi_reduction <add>, %61, %cst_30 [2] : vector<2x8x8xf32> to vector<2x8xf32>
    %63 = vector.shape_cast %62 : vector<2x8xf32> to vector<2x8x1xf32>
    %64 = tpu.reciprocal %63 {approx = true} : vector<2x8x1xf32> -> vector<2x8x1xf32>
    %65 = vector.broadcast %64 : vector<2x8x1xf32> to vector<2x8x8xf32>
    %66 = arith.mulf %61, %65 : vector<2x8x8xf32>
    "tpu.trace_start"() <{level = 10 : i32, message = "bqk,bkd->bqd"}> : () -> ()
    %cst_31 = arith.constant dense<0.000000e+00> : vector<2x8x8xf32>
    %67 = tpu.matmul %66, %51, %cst_31 {dimension_numbers = #tpu.dot_dimension_numbers<[2], [1], [1], [2], [0, 0, 0, 1, 1, 2], [0], [0]>} : vector<2x8x8xf32>, vector<2x8x8xf32>, vector<2x8x8xf32> -> vector<2x8x8xf32>
    "tpu.trace_stop"() : () -> ()
    %68 = vector.extract_strided_slice %44 {offsets = [0, 0, 8], sizes = [2, 8, 8], strides = [1, 1, 1]} : vector<2x8x32xf32> to vector<2x8x8xf32>
    %69 = vector.extract_strided_slice %46 {offsets = [0, 0, 8], sizes = [2, 8, 8], strides = [1, 1, 1]} : vector<2x8x32xf32> to vector<2x8x8xf32>
    %70 = vector.extract_strided_slice %48 {offsets = [0, 0, 8], sizes = [2, 8, 8], strides = [1, 1, 1]} : vector<2x8x32xf32> to vector<2x8x8xf32>
    "tpu.trace_start"() <{level = 10 : i32, message = "bqd,bkd->bqk"}> : () -> ()
    %cst_32 = arith.constant dense<0.000000e+00> : vector<2x8x8xf32>
    %71 = tpu.matmul %68, %69, %cst_32 {dimension_numbers = #tpu.dot_dimension_numbers<[2], [2], [1], [1], [0, 0, 0, 1, 1, 1], [0], [0]>} : vector<2x8x8xf32>, vector<2x8x8xf32>, vector<2x8x8xf32> -> vector<2x8x8xf32>
    "tpu.trace_stop"() : () -> ()
    %cst_33 = arith.constant 0.353553385 : f32
    %72 = vector.broadcast %cst_33 : f32 to vector<2x8x8xf32>
    %73 = arith.mulf %71, %72 : vector<2x8x8xf32>
    %cst_34 = arith.constant -1.000000e+09 : f32
    %74 = vector.broadcast %cst_34 : f32 to vector<2x8x8xf32>
    %75 = arith.select %9, %73, %74 : vector<2x8x8xi1>, vector<2x8x8xf32>
    %cst_35 = arith.constant dense<0xFF800000> : vector<2x8xf32>
    %76 = vector.multi_reduction <maximumf>, %75, %cst_35 [2] : vector<2x8x8xf32> to vector<2x8xf32>
    %77 = vector.shape_cast %76 : vector<2x8xf32> to vector<2x8x1xf32>
    %78 = vector.broadcast %77 : vector<2x8x1xf32> to vector<2x8x8xf32>
    %79 = arith.subf %75, %78 : vector<2x8x8xf32>
    %80 = math.exp %79 : vector<2x8x8xf32>
    %cst_36 = arith.constant dense<0.000000e+00> : vector<2x8xf32>
    %81 = vector.multi_reduction <add>, %80, %cst_36 [2] : vector<2x8x8xf32> to vector<2x8xf32>
    %82 = vector.shape_cast %81 : vector<2x8xf32> to vector<2x8x1xf32>
    %83 = tpu.reciprocal %82 {approx = true} : vector<2x8x1xf32> -> vector<2x8x1xf32>
    %84 = vector.broadcast %83 : vector<2x8x1xf32> to vector<2x8x8xf32>
    %85 = arith.mulf %80, %84 : vector<2x8x8xf32>
    "tpu.trace_start"() <{level = 10 : i32, message = "bqk,bkd->bqd"}> : () -> ()
    %cst_37 = arith.constant dense<0.000000e+00> : vector<2x8x8xf32>
    %86 = tpu.matmul %85, %70, %cst_37 {dimension_numbers = #tpu.dot_dimension_numbers<[2], [1], [1], [2], [0, 0, 0, 1, 1, 2], [0], [0]>} : vector<2x8x8xf32>, vector<2x8x8xf32>, vector<2x8x8xf32> -> vector<2x8x8xf32>
    "tpu.trace_stop"() : () -> ()
    %87 = vector.extract_strided_slice %44 {offsets = [0, 0, 16], sizes = [2, 8, 8], strides = [1, 1, 1]} : vector<2x8x32xf32> to vector<2x8x8xf32>
    %88 = vector.extract_strided_slice %46 {offsets = [0, 0, 16], sizes = [2, 8, 8], strides = [1, 1, 1]} : vector<2x8x32xf32> to vector<2x8x8xf32>
    %89 = vector.extract_strided_slice %48 {offsets = [0, 0, 16], sizes = [2, 8, 8], strides = [1, 1, 1]} : vector<2x8x32xf32> to vector<2x8x8xf32>
    "tpu.trace_start"() <{level = 10 : i32, message = "bqd,bkd->bqk"}> : () -> ()
    %cst_38 = arith.constant dense<0.000000e+00> : vector<2x8x8xf32>
    %90 = tpu.matmul %87, %88, %cst_38 {dimension_numbers = #tpu.dot_dimension_numbers<[2], [2], [1], [1], [0, 0, 0, 1, 1, 1], [0], [0]>} : vector<2x8x8xf32>, vector<2x8x8xf32>, vector<2x8x8xf32> -> vector<2x8x8xf32>
    "tpu.trace_stop"() : () -> ()
    %cst_39 = arith.constant 0.353553385 : f32
    %91 = vector.broadcast %cst_39 : f32 to vector<2x8x8xf32>
    %92 = arith.mulf %90, %91 : vector<2x8x8xf32>
    %cst_40 = arith.constant -1.000000e+09 : f32
    %93 = vector.broadcast %cst_40 : f32 to vector<2x8x8xf32>
    %94 = arith.select %9, %92, %93 : vector<2x8x8xi1>, vector<2x8x8xf32>
    %cst_41 = arith.constant dense<0xFF800000> : vector<2x8xf32>
    %95 = vector.multi_reduction <maximumf>, %94, %cst_41 [2] : vector<2x8x8xf32> to vector<2x8xf32>
    %96 = vector.shape_cast %95 : vector<2x8xf32> to vector<2x8x1xf32>
    %97 = vector.broadcast %96 : vector<2x8x1xf32> to vector<2x8x8xf32>
    %98 = arith.subf %94, %97 : vector<2x8x8xf32>
    %99 = math.exp %98 : vector<2x8x8xf32>
    %cst_42 = arith.constant dense<0.000000e+00> : vector<2x8xf32>
    %100 = vector.multi_reduction <add>, %99, %cst_42 [2] : vector<2x8x8xf32> to vector<2x8xf32>
    %101 = vector.shape_cast %100 : vector<2x8xf32> to vector<2x8x1xf32>
    %102 = tpu.reciprocal %101 {approx = true} : vector<2x8x1xf32> -> vector<2x8x1xf32>
    %103 = vector.broadcast %102 : vector<2x8x1xf32> to vector<2x8x8xf32>
    %104 = arith.mulf %99, %103 : vector<2x8x8xf32>
    "tpu.trace_start"() <{level = 10 : i32, message = "bqk,bkd->bqd"}> : () -> ()
    %cst_43 = arith.constant dense<0.000000e+00> : vector<2x8x8xf32>
    %105 = tpu.matmul %104, %89, %cst_43 {dimension_numbers = #tpu.dot_dimension_numbers<[2], [1], [1], [2], [0, 0, 0, 1, 1, 2], [0], [0]>} : vector<2x8x8xf32>, vector<2x8x8xf32>, vector<2x8x8xf32> -> vector<2x8x8xf32>
    "tpu.trace_stop"() : () -> ()
    %106 = vector.extract_strided_slice %44 {offsets = [0, 0, 24], sizes = [2, 8, 8], strides = [1, 1, 1]} : vector<2x8x32xf32> to vector<2x8x8xf32>
    %107 = vector.extract_strided_slice %46 {offsets = [0, 0, 24], sizes = [2, 8, 8], strides = [1, 1, 1]} : vector<2x8x32xf32> to vector<2x8x8xf32>
    %108 = vector.extract_strided_slice %48 {offsets = [0, 0, 24], sizes = [2, 8, 8], strides = [1, 1, 1]} : vector<2x8x32xf32> to vector<2x8x8xf32>
    "tpu.trace_start"() <{level = 10 : i32, message = "bqd,bkd->bqk"}> : () -> ()
    %cst_44 = arith.constant dense<0.000000e+00> : vector<2x8x8xf32>
    %109 = tpu.matmul %106, %107, %cst_44 {dimension_numbers = #tpu.dot_dimension_numbers<[2], [2], [1], [1], [0, 0, 0, 1, 1, 1], [0], [0]>} : vector<2x8x8xf32>, vector<2x8x8xf32>, vector<2x8x8xf32> -> vector<2x8x8xf32>
    "tpu.trace_stop"() : () -> ()
    %cst_45 = arith.constant 0.353553385 : f32
    %110 = vector.broadcast %cst_45 : f32 to vector<2x8x8xf32>
    %111 = arith.mulf %109, %110 : vector<2x8x8xf32>
    %cst_46 = arith.constant -1.000000e+09 : f32
    %112 = vector.broadcast %cst_46 : f32 to vector<2x8x8xf32>
    %113 = arith.select %9, %111, %112 : vector<2x8x8xi1>, vector<2x8x8xf32>
    %cst_47 = arith.constant dense<0xFF800000> : vector<2x8xf32>
    %114 = vector.multi_reduction <maximumf>, %113, %cst_47 [2] : vector<2x8x8xf32> to vector<2x8xf32>
    %115 = vector.shape_cast %114 : vector<2x8xf32> to vector<2x8x1xf32>
    %116 = vector.broadcast %115 : vector<2x8x1xf32> to vector<2x8x8xf32>
    %117 = arith.subf %113, %116 : vector<2x8x8xf32>
    %118 = math.exp %117 : vector<2x8x8xf32>
    %cst_48 = arith.constant dense<0.000000e+00> : vector<2x8xf32>
    %119 = vector.multi_reduction <add>, %118, %cst_48 [2] : vector<2x8x8xf32> to vector<2x8xf32>
    %120 = vector.shape_cast %119 : vector<2x8xf32> to vector<2x8x1xf32>
    %121 = tpu.reciprocal %120 {approx = true} : vector<2x8x1xf32> -> vector<2x8x1xf32>
    %122 = vector.broadcast %121 : vector<2x8x1xf32> to vector<2x8x8xf32>
    %123 = arith.mulf %118, %122 : vector<2x8x8xf32>
    "tpu.trace_start"() <{level = 10 : i32, message = "bqk,bkd->bqd"}> : () -> ()
    %cst_49 = arith.constant dense<0.000000e+00> : vector<2x8x8xf32>
    %124 = tpu.matmul %123, %108, %cst_49 {dimension_numbers = #tpu.dot_dimension_numbers<[2], [1], [1], [2], [0, 0, 0, 1, 1, 2], [0], [0]>} : vector<2x8x8xf32>, vector<2x8x8xf32>, vector<2x8x8xf32> -> vector<2x8x8xf32>
    "tpu.trace_stop"() : () -> ()
    %125 = tpu.concatenate %67, %86, %105, %124 in 2 : vector<2x8x8xf32>, vector<2x8x8xf32>, vector<2x8x8xf32>, vector<2x8x8xf32> -> vector<2x8x32xf32>
    %126 = vector.shape_cast %125 : vector<2x8x32xf32> to vector<16x32xf32>
    %c0_50 = arith.constant 0 : index
    %c0_51 = arith.constant 0 : index
    %c0_52 = arith.constant 0 : index
    %127 = vector.load %arg7[%c0_50, %c0_51, %c0_52] : memref<2x32x32xf32, #tpu.memory_space<vmem>>, vector<1x32x32xf32>
    %128 = vector.shape_cast %127 : vector<1x32x32xf32> to vector<32x32xf32>
    %cst_53 = arith.constant dense<0.000000e+00> : vector<16x32xf32>
    %129 = tpu.matmul %126, %128, %cst_53 {dimension_numbers = #tpu.dot_dimension_numbers<[1], [0], [0], [1], [0, 0, 1, 1], [], []>} : vector<16x32xf32>, vector<32x32xf32>, vector<16x32xf32> -> vector<16x32xf32>
    %c0_54 = arith.constant 0 : index
    %c0_55 = arith.constant 0 : index
    %c0_56 = arith.constant 0 : index
    %130 = vector.load %arg8[%c0_54, %c0_55, %c0_56] : memref<2x1x32xf32, #tpu.memory_space<vmem>>, vector<1x1x32xf32>
    %131 = vector.shape_cast %130 : vector<1x1x32xf32> to vector<1x32xf32>
    %132 = vector.broadcast %131 : vector<1x32xf32> to vector<16x32xf32>
    %133 = arith.addf %129, %132 : vector<16x32xf32>
    %134 = arith.addf %4, %133 : vector<16x32xf32>
    %c0_57 = arith.constant 0 : index
    %c0_58 = arith.constant 0 : index
    %c0_59 = arith.constant 0 : index
    %135 = vector.load %arg9[%c0_57, %c0_58, %c0_59] : memref<2x1x32xf32, #tpu.memory_space<vmem>>, vector<1x1x32xf32>
    %136 = vector.shape_cast %135 : vector<1x1x32xf32> to vector<1x32xf32>
    %c0_60 = arith.constant 0 : index
    %c0_61 = arith.constant 0 : index
    %c0_62 = arith.constant 0 : index
    %137 = vector.load %arg10[%c0_60, %c0_61, %c0_62] : memref<2x1x32xf32, #tpu.memory_space<vmem>>, vector<1x1x32xf32>
    %138 = vector.shape_cast %137 : vector<1x1x32xf32> to vector<1x32xf32>
    %cst_63 = arith.constant dense<0.000000e+00> : vector<16xf32>
    %139 = vector.multi_reduction <add>, %134, %cst_63 [1] : vector<16x32xf32> to vector<16xf32>
    %140 = vector.shape_cast %139 : vector<16xf32> to vector<16x1xf32>
    %cst_64 = arith.constant 3.200000e+01 : f32
    %141 = vector.broadcast %cst_64 : f32 to vector<16x1xf32>
    %142 = arith.divf %140, %141 : vector<16x1xf32>
    %143 = vector.broadcast %142 : vector<16x1xf32> to vector<16x32xf32>
    %144 = arith.subf %134, %143 : vector<16x32xf32>
    %145 = arith.mulf %144, %144 : vector<16x32xf32>
    %cst_65 = arith.constant dense<0.000000e+00> : vector<16xf32>
    %146 = vector.multi_reduction <add>, %145, %cst_65 [1] : vector<16x32xf32> to vector<16xf32>
    %147 = vector.shape_cast %146 : vector<16xf32> to vector<16x1xf32>
    %cst_66 = arith.constant 3.200000e+01 : f32
    %148 = vector.broadcast %cst_66 : f32 to vector<16x1xf32>
    %149 = arith.divf %147, %148 : vector<16x1xf32>
    %150 = vector.broadcast %142 : vector<16x1xf32> to vector<16x32xf32>
    %151 = arith.subf %134, %150 : vector<16x32xf32>
    %cst_67 = arith.constant 9.99999974E-6 : f32
    %152 = vector.broadcast %cst_67 : f32 to vector<16x1xf32>
    %153 = arith.addf %149, %152 : vector<16x1xf32>
    %154 = math.rsqrt %153 : vector<16x1xf32>
    %155 = vector.broadcast %154 : vector<16x1xf32> to vector<16x32xf32>
    %156 = arith.mulf %151, %155 : vector<16x32xf32>
    %157 = vector.broadcast %136 : vector<1x32xf32> to vector<16x32xf32>
    %158 = arith.mulf %156, %157 : vector<16x32xf32>
    %159 = vector.broadcast %138 : vector<1x32xf32> to vector<16x32xf32>
    %160 = arith.addf %158, %159 : vector<16x32xf32>
    %c0_68 = arith.constant 0 : index
    %c0_69 = arith.constant 0 : index
    %c0_70 = arith.constant 0 : index
    %161 = vector.load %arg11[%c0_68, %c0_69, %c0_70] : memref<2x32x64xf32, #tpu.memory_space<vmem>>, vector<1x32x64xf32>
    %162 = vector.shape_cast %161 : vector<1x32x64xf32> to vector<32x64xf32>
    %cst_71 = arith.constant dense<0.000000e+00> : vector<16x64xf32>
    %163 = tpu.matmul %160, %162, %cst_71 {dimension_numbers = #tpu.dot_dimension_numbers<[1], [0], [0], [1], [0, 0, 1, 1], [], []>} : vector<16x32xf32>, vector<32x64xf32>, vector<16x64xf32> -> vector<16x64xf32>
    %c0_72 = arith.constant 0 : index
    %c0_73 = arith.constant 0 : index
    %c0_74 = arith.constant 0 : index
    %164 = vector.load %arg12[%c0_72, %c0_73, %c0_74] : memref<2x1x64xf32, #tpu.memory_space<vmem>>, vector<1x1x64xf32>
    %165 = vector.shape_cast %164 : vector<1x1x64xf32> to vector<1x64xf32>
    %166 = vector.broadcast %165 : vector<1x64xf32> to vector<16x64xf32>
    %167 = arith.addf %163, %166 : vector<16x64xf32>
    %cst_75 = arith.constant 0.000000e+00 : f32
    %168 = vector.broadcast %cst_75 : f32 to vector<16x64xf32>
    %169 = arith.maximumf %167, %168 : vector<16x64xf32>
    %c0_76 = arith.constant 0 : index
    %c0_77 = arith.constant 0 : index
    %c0_78 = arith.constant 0 : index
    %170 = vector.load %arg13[%c0_76, %c0_77, %c0_78] : memref<2x64x32xf32, #tpu.memory_space<vmem>>, vector<1x64x32xf32>
    %171 = vector.shape_cast %170 : vector<1x64x32xf32> to vector<64x32xf32>
    %cst_79 = arith.constant dense<0.000000e+00> : vector<16x32xf32>
    %172 = tpu.matmul %169, %171, %cst_79 {dimension_numbers = #tpu.dot_dimension_numbers<[1], [0], [0], [1], [0, 0, 1, 1], [], []>} : vector<16x64xf32>, vector<64x32xf32>, vector<16x32xf32> -> vector<16x32xf32>
    %c0_80 = arith.constant 0 : index
    %c0_81 = arith.constant 0 : index
    %c0_82 = arith.constant 0 : index
    %173 = vector.load %arg14[%c0_80, %c0_81, %c0_82] : memref<2x1x32xf32, #tpu.memory_space<vmem>>, vector<1x1x32xf32>
    %174 = vector.shape_cast %173 : vector<1x1x32xf32> to vector<1x32xf32>
    %175 = vector.broadcast %174 : vector<1x32xf32> to vector<16x32xf32>
    %176 = arith.addf %172, %175 : vector<16x32xf32>
    %177 = arith.addf %134, %176 : vector<16x32xf32>
    %c1 = arith.constant 1 : index
    %c0_83 = arith.constant 0 : index
    %c0_84 = arith.constant 0 : index
    %178 = vector.load %arg3[%c1, %c0_83, %c0_84] : memref<2x1x32xf32, #tpu.memory_space<vmem>>, vector<1x1x32xf32>
    %179 = vector.shape_cast %178 : vector<1x1x32xf32> to vector<1x32xf32>
    %c1_85 = arith.constant 1 : index
    %c0_86 = arith.constant 0 : index
    %c0_87 = arith.constant 0 : index
    %180 = vector.load %arg4[%c1_85, %c0_86, %c0_87] : memref<2x1x32xf32, #tpu.memory_space<vmem>>, vector<1x1x32xf32>
    %181 = vector.shape_cast %180 : vector<1x1x32xf32> to vector<1x32xf32>
    %cst_88 = arith.constant dense<0.000000e+00> : vector<16xf32>
    %182 = vector.multi_reduction <add>, %177, %cst_88 [1] : vector<16x32xf32> to vector<16xf32>
    %183 = vector.shape_cast %182 : vector<16xf32> to vector<16x1xf32>
    %cst_89 = arith.constant 3.200000e+01 : f32
    %184 = vector.broadcast %cst_89 : f32 to vector<16x1xf32>
    %185 = arith.divf %183, %184 : vector<16x1xf32>
    %186 = vector.broadcast %185 : vector<16x1xf32> to vector<16x32xf32>
    %187 = arith.subf %177, %186 : vector<16x32xf32>
    %188 = arith.mulf %187, %187 : vector<16x32xf32>
    %cst_90 = arith.constant dense<0.000000e+00> : vector<16xf32>
    %189 = vector.multi_reduction <add>, %188, %cst_90 [1] : vector<16x32xf32> to vector<16xf32>
    %190 = vector.shape_cast %189 : vector<16xf32> to vector<16x1xf32>
    %cst_91 = arith.constant 3.200000e+01 : f32
    %191 = vector.broadcast %cst_91 : f32 to vector<16x1xf32>
    %192 = arith.divf %190, %191 : vector<16x1xf32>
    %193 = vector.broadcast %185 : vector<16x1xf32> to vector<16x32xf32>
    %194 = arith.subf %177, %193 : vector<16x32xf32>
    %cst_92 = arith.constant 9.99999974E-6 : f32
    %195 = vector.broadcast %cst_92 : f32 to vector<16x1xf32>
    %196 = arith.addf %192, %195 : vector<16x1xf32>
    %197 = math.rsqrt %196 : vector<16x1xf32>
    %198 = vector.broadcast %197 : vector<16x1xf32> to vector<16x32xf32>
    %199 = arith.mulf %194, %198 : vector<16x32xf32>
    %200 = vector.broadcast %179 : vector<1x32xf32> to vector<16x32xf32>
    %201 = arith.mulf %199, %200 : vector<16x32xf32>
    %202 = vector.broadcast %181 : vector<1x32xf32> to vector<16x32xf32>
    %203 = arith.addf %201, %202 : vector<16x32xf32>
    %c1_93 = arith.constant 1 : index
    %c0_94 = arith.constant 0 : index
    %c0_95 = arith.constant 0 : index
    %204 = vector.load %arg5[%c1_93, %c0_94, %c0_95] : memref<2x32x96xf32, #tpu.memory_space<vmem>>, vector<1x32x96xf32>
    %205 = vector.shape_cast %204 : vector<1x32x96xf32> to vector<32x96xf32>
    %cst_96 = arith.constant dense<0.000000e+00> : vector<16x96xf32>
    %206 = tpu.matmul %203, %205, %cst_96 {dimension_numbers = #tpu.dot_dimension_numbers<[1], [0], [0], [1], [0, 0, 1, 1], [], []>} : vector<16x32xf32>, vector<32x96xf32>, vector<16x96xf32> -> vector<16x96xf32>
    %c1_97 = arith.constant 1 : index
    %c0_98 = arith.constant 0 : index
    %c0_99 = arith.constant 0 : index
    %207 = vector.load %arg6[%c1_97, %c0_98, %c0_99] : memref<2x1x96xf32, #tpu.memory_space<vmem>>, vector<1x1x96xf32>
    %208 = vector.shape_cast %207 : vector<1x1x96xf32> to vector<1x96xf32>
    %209 = vector.broadcast %208 : vector<1x96xf32> to vector<16x96xf32>
    %210 = arith.addf %206, %209 : vector<16x96xf32>
    %211 = vector.extract_strided_slice %210 {offsets = [0, 0], sizes = [16, 32], strides = [1, 1]} : vector<16x96xf32> to vector<16x32xf32>
    %212 = vector.shape_cast %211 : vector<16x32xf32> to vector<2x8x32xf32>
    %213 = vector.extract_strided_slice %210 {offsets = [0, 32], sizes = [16, 32], strides = [1, 1]} : vector<16x96xf32> to vector<16x32xf32>
    %214 = vector.shape_cast %213 : vector<16x32xf32> to vector<2x8x32xf32>
    %215 = vector.extract_strided_slice %210 {offsets = [0, 64], sizes = [16, 32], strides = [1, 1]} : vector<16x96xf32> to vector<16x32xf32>
    %216 = vector.shape_cast %215 : vector<16x32xf32> to vector<2x8x32xf32>
    %217 = vector.extract_strided_slice %212 {offsets = [0, 0, 0], sizes = [2, 8, 8], strides = [1, 1, 1]} : vector<2x8x32xf32> to vector<2x8x8xf32>
    %218 = vector.extract_strided_slice %214 {offsets = [0, 0, 0], sizes = [2, 8, 8], strides = [1, 1, 1]} : vector<2x8x32xf32> to vector<2x8x8xf32>
    %219 = vector.extract_strided_slice %216 {offsets = [0, 0, 0], sizes = [2, 8, 8], strides = [1, 1, 1]} : vector<2x8x32xf32> to vector<2x8x8xf32>
    "tpu.trace_start"() <{level = 10 : i32, message = "bqd,bkd->bqk"}> : () -> ()
    %cst_100 = arith.constant dense<0.000000e+00> : vector<2x8x8xf32>
    %220 = tpu.matmul %217, %218, %cst_100 {dimension_numbers = #tpu.dot_dimension_numbers<[2], [2], [1], [1], [0, 0, 0, 1, 1, 1], [0], [0]>} : vector<2x8x8xf32>, vector<2x8x8xf32>, vector<2x8x8xf32> -> vector<2x8x8xf32>
    "tpu.trace_stop"() : () -> ()
    %cst_101 = arith.constant 0.353553385 : f32
    %221 = vector.broadcast %cst_101 : f32 to vector<2x8x8xf32>
    %222 = arith.mulf %220, %221 : vector<2x8x8xf32>
    %cst_102 = arith.constant -1.000000e+09 : f32
    %223 = vector.broadcast %cst_102 : f32 to vector<2x8x8xf32>
    %224 = arith.select %9, %222, %223 : vector<2x8x8xi1>, vector<2x8x8xf32>
    %cst_103 = arith.constant dense<0xFF800000> : vector<2x8xf32>
    %225 = vector.multi_reduction <maximumf>, %224, %cst_103 [2] : vector<2x8x8xf32> to vector<2x8xf32>
    %226 = vector.shape_cast %225 : vector<2x8xf32> to vector<2x8x1xf32>
    %227 = vector.broadcast %226 : vector<2x8x1xf32> to vector<2x8x8xf32>
    %228 = arith.subf %224, %227 : vector<2x8x8xf32>
    %229 = math.exp %228 : vector<2x8x8xf32>
    %cst_104 = arith.constant dense<0.000000e+00> : vector<2x8xf32>
    %230 = vector.multi_reduction <add>, %229, %cst_104 [2] : vector<2x8x8xf32> to vector<2x8xf32>
    %231 = vector.shape_cast %230 : vector<2x8xf32> to vector<2x8x1xf32>
    %232 = tpu.reciprocal %231 {approx = true} : vector<2x8x1xf32> -> vector<2x8x1xf32>
    %233 = vector.broadcast %232 : vector<2x8x1xf32> to vector<2x8x8xf32>
    %234 = arith.mulf %229, %233 : vector<2x8x8xf32>
    "tpu.trace_start"() <{level = 10 : i32, message = "bqk,bkd->bqd"}> : () -> ()
    %cst_105 = arith.constant dense<0.000000e+00> : vector<2x8x8xf32>
    %235 = tpu.matmul %234, %219, %cst_105 {dimension_numbers = #tpu.dot_dimension_numbers<[2], [1], [1], [2], [0, 0, 0, 1, 1, 2], [0], [0]>} : vector<2x8x8xf32>, vector<2x8x8xf32>, vector<2x8x8xf32> -> vector<2x8x8xf32>
    "tpu.trace_stop"() : () -> ()
    %236 = vector.extract_strided_slice %212 {offsets = [0, 0, 8], sizes = [2, 8, 8], strides = [1, 1, 1]} : vector<2x8x32xf32> to vector<2x8x8xf32>
    %237 = vector.extract_strided_slice %214 {offsets = [0, 0, 8], sizes = [2, 8, 8], strides = [1, 1, 1]} : vector<2x8x32xf32> to vector<2x8x8xf32>
    %238 = vector.extract_strided_slice %216 {offsets = [0, 0, 8], sizes = [2, 8, 8], strides = [1, 1, 1]} : vector<2x8x32xf32> to vector<2x8x8xf32>
    "tpu.trace_start"() <{level = 10 : i32, message = "bqd,bkd->bqk"}> : () -> ()
    %cst_106 = arith.constant dense<0.000000e+00> : vector<2x8x8xf32>
    %239 = tpu.matmul %236, %237, %cst_106 {dimension_numbers = #tpu.dot_dimension_numbers<[2], [2], [1], [1], [0, 0, 0, 1, 1, 1], [0], [0]>} : vector<2x8x8xf32>, vector<2x8x8xf32>, vector<2x8x8xf32> -> vector<2x8x8xf32>
    "tpu.trace_stop"() : () -> ()
    %cst_107 = arith.constant 0.353553385 : f32
    %240 = vector.broadcast %cst_107 : f32 to vector<2x8x8xf32>
    %241 = arith.mulf %239, %240 : vector<2x8x8xf32>
    %cst_108 = arith.constant -1.000000e+09 : f32
    %242 = vector.broadcast %cst_108 : f32 to vector<2x8x8xf32>
    %243 = arith.select %9, %241, %242 : vector<2x8x8xi1>, vector<2x8x8xf32>
    %cst_109 = arith.constant dense<0xFF800000> : vector<2x8xf32>
    %244 = vector.multi_reduction <maximumf>, %243, %cst_109 [2] : vector<2x8x8xf32> to vector<2x8xf32>
    %245 = vector.shape_cast %244 : vector<2x8xf32> to vector<2x8x1xf32>
    %246 = vector.broadcast %245 : vector<2x8x1xf32> to vector<2x8x8xf32>
    %247 = arith.subf %243, %246 : vector<2x8x8xf32>
    %248 = math.exp %247 : vector<2x8x8xf32>
    %cst_110 = arith.constant dense<0.000000e+00> : vector<2x8xf32>
    %249 = vector.multi_reduction <add>, %248, %cst_110 [2] : vector<2x8x8xf32> to vector<2x8xf32>
    %250 = vector.shape_cast %249 : vector<2x8xf32> to vector<2x8x1xf32>
    %251 = tpu.reciprocal %250 {approx = true} : vector<2x8x1xf32> -> vector<2x8x1xf32>
    %252 = vector.broadcast %251 : vector<2x8x1xf32> to vector<2x8x8xf32>
    %253 = arith.mulf %248, %252 : vector<2x8x8xf32>
    "tpu.trace_start"() <{level = 10 : i32, message = "bqk,bkd->bqd"}> : () -> ()
    %cst_111 = arith.constant dense<0.000000e+00> : vector<2x8x8xf32>
    %254 = tpu.matmul %253, %238, %cst_111 {dimension_numbers = #tpu.dot_dimension_numbers<[2], [1], [1], [2], [0, 0, 0, 1, 1, 2], [0], [0]>} : vector<2x8x8xf32>, vector<2x8x8xf32>, vector<2x8x8xf32> -> vector<2x8x8xf32>
    "tpu.trace_stop"() : () -> ()
    %255 = vector.extract_strided_slice %212 {offsets = [0, 0, 16], sizes = [2, 8, 8], strides = [1, 1, 1]} : vector<2x8x32xf32> to vector<2x8x8xf32>
    %256 = vector.extract_strided_slice %214 {offsets = [0, 0, 16], sizes = [2, 8, 8], strides = [1, 1, 1]} : vector<2x8x32xf32> to vector<2x8x8xf32>
    %257 = vector.extract_strided_slice %216 {offsets = [0, 0, 16], sizes = [2, 8, 8], strides = [1, 1, 1]} : vector<2x8x32xf32> to vector<2x8x8xf32>
    "tpu.trace_start"() <{level = 10 : i32, message = "bqd,bkd->bqk"}> : () -> ()
    %cst_112 = arith.constant dense<0.000000e+00> : vector<2x8x8xf32>
    %258 = tpu.matmul %255, %256, %cst_112 {dimension_numbers = #tpu.dot_dimension_numbers<[2], [2], [1], [1], [0, 0, 0, 1, 1, 1], [0], [0]>} : vector<2x8x8xf32>, vector<2x8x8xf32>, vector<2x8x8xf32> -> vector<2x8x8xf32>
    "tpu.trace_stop"() : () -> ()
    %cst_113 = arith.constant 0.353553385 : f32
    %259 = vector.broadcast %cst_113 : f32 to vector<2x8x8xf32>
    %260 = arith.mulf %258, %259 : vector<2x8x8xf32>
    %cst_114 = arith.constant -1.000000e+09 : f32
    %261 = vector.broadcast %cst_114 : f32 to vector<2x8x8xf32>
    %262 = arith.select %9, %260, %261 : vector<2x8x8xi1>, vector<2x8x8xf32>
    %cst_115 = arith.constant dense<0xFF800000> : vector<2x8xf32>
    %263 = vector.multi_reduction <maximumf>, %262, %cst_115 [2] : vector<2x8x8xf32> to vector<2x8xf32>
    %264 = vector.shape_cast %263 : vector<2x8xf32> to vector<2x8x1xf32>
    %265 = vector.broadcast %264 : vector<2x8x1xf32> to vector<2x8x8xf32>
    %266 = arith.subf %262, %265 : vector<2x8x8xf32>
    %267 = math.exp %266 : vector<2x8x8xf32>
    %cst_116 = arith.constant dense<0.000000e+00> : vector<2x8xf32>
    %268 = vector.multi_reduction <add>, %267, %cst_116 [2] : vector<2x8x8xf32> to vector<2x8xf32>
    %269 = vector.shape_cast %268 : vector<2x8xf32> to vector<2x8x1xf32>
    %270 = tpu.reciprocal %269 {approx = true} : vector<2x8x1xf32> -> vector<2x8x1xf32>
    %271 = vector.broadcast %270 : vector<2x8x1xf32> to vector<2x8x8xf32>
    %272 = arith.mulf %267, %271 : vector<2x8x8xf32>
    "tpu.trace_start"() <{level = 10 : i32, message = "bqk,bkd->bqd"}> : () -> ()
    %cst_117 = arith.constant dense<0.000000e+00> : vector<2x8x8xf32>
    %273 = tpu.matmul %272, %257, %cst_117 {dimension_numbers = #tpu.dot_dimension_numbers<[2], [1], [1], [2], [0, 0, 0, 1, 1, 2], [0], [0]>} : vector<2x8x8xf32>, vector<2x8x8xf32>, vector<2x8x8xf32> -> vector<2x8x8xf32>
    "tpu.trace_stop"() : () -> ()
    %274 = vector.extract_strided_slice %212 {offsets = [0, 0, 24], sizes = [2, 8, 8], strides = [1, 1, 1]} : vector<2x8x32xf32> to vector<2x8x8xf32>
    %275 = vector.extract_strided_slice %214 {offsets = [0, 0, 24], sizes = [2, 8, 8], strides = [1, 1, 1]} : vector<2x8x32xf32> to vector<2x8x8xf32>
    %276 = vector.extract_strided_slice %216 {offsets = [0, 0, 24], sizes = [2, 8, 8], strides = [1, 1, 1]} : vector<2x8x32xf32> to vector<2x8x8xf32>
    "tpu.trace_start"() <{level = 10 : i32, message = "bqd,bkd->bqk"}> : () -> ()
    %cst_118 = arith.constant dense<0.000000e+00> : vector<2x8x8xf32>
    %277 = tpu.matmul %274, %275, %cst_118 {dimension_numbers = #tpu.dot_dimension_numbers<[2], [2], [1], [1], [0, 0, 0, 1, 1, 1], [0], [0]>} : vector<2x8x8xf32>, vector<2x8x8xf32>, vector<2x8x8xf32> -> vector<2x8x8xf32>
    "tpu.trace_stop"() : () -> ()
    %cst_119 = arith.constant 0.353553385 : f32
    %278 = vector.broadcast %cst_119 : f32 to vector<2x8x8xf32>
    %279 = arith.mulf %277, %278 : vector<2x8x8xf32>
    %cst_120 = arith.constant -1.000000e+09 : f32
    %280 = vector.broadcast %cst_120 : f32 to vector<2x8x8xf32>
    %281 = arith.select %9, %279, %280 : vector<2x8x8xi1>, vector<2x8x8xf32>
    %cst_121 = arith.constant dense<0xFF800000> : vector<2x8xf32>
    %282 = vector.multi_reduction <maximumf>, %281, %cst_121 [2] : vector<2x8x8xf32> to vector<2x8xf32>
    %283 = vector.shape_cast %282 : vector<2x8xf32> to vector<2x8x1xf32>
    %284 = vector.broadcast %283 : vector<2x8x1xf32> to vector<2x8x8xf32>
    %285 = arith.subf %281, %284 : vector<2x8x8xf32>
    %286 = math.exp %285 : vector<2x8x8xf32>
    %cst_122 = arith.constant dense<0.000000e+00> : vector<2x8xf32>
    %287 = vector.multi_reduction <add>, %286, %cst_122 [2] : vector<2x8x8xf32> to vector<2x8xf32>
    %288 = vector.shape_cast %287 : vector<2x8xf32> to vector<2x8x1xf32>
    %289 = tpu.reciprocal %288 {approx = true} : vector<2x8x1xf32> -> vector<2x8x1xf32>
    %290 = vector.broadcast %289 : vector<2x8x1xf32> to vector<2x8x8xf32>
    %291 = arith.mulf %286, %290 : vector<2x8x8xf32>
    "tpu.trace_start"() <{level = 10 : i32, message = "bqk,bkd->bqd"}> : () -> ()
    %cst_123 = arith.constant dense<0.000000e+00> : vector<2x8x8xf32>
    %292 = tpu.matmul %291, %276, %cst_123 {dimension_numbers = #tpu.dot_dimension_numbers<[2], [1], [1], [2], [0, 0, 0, 1, 1, 2], [0], [0]>} : vector<2x8x8xf32>, vector<2x8x8xf32>, vector<2x8x8xf32> -> vector<2x8x8xf32>
    "tpu.trace_stop"() : () -> ()
    %293 = tpu.concatenate %235, %254, %273, %292 in 2 : vector<2x8x8xf32>, vector<2x8x8xf32>, vector<2x8x8xf32>, vector<2x8x8xf32> -> vector<2x8x32xf32>
    %294 = vector.shape_cast %293 : vector<2x8x32xf32> to vector<16x32xf32>
    %c1_124 = arith.constant 1 : index
    %c0_125 = arith.constant 0 : index
    %c0_126 = arith.constant 0 : index
    %295 = vector.load %arg7[%c1_124, %c0_125, %c0_126] : memref<2x32x32xf32, #tpu.memory_space<vmem>>, vector<1x32x32xf32>
    %296 = vector.shape_cast %295 : vector<1x32x32xf32> to vector<32x32xf32>
    %cst_127 = arith.constant dense<0.000000e+00> : vector<16x32xf32>
    %297 = tpu.matmul %294, %296, %cst_127 {dimension_numbers = #tpu.dot_dimension_numbers<[1], [0], [0], [1], [0, 0, 1, 1], [], []>} : vector<16x32xf32>, vector<32x32xf32>, vector<16x32xf32> -> vector<16x32xf32>
    %c1_128 = arith.constant 1 : index
    %c0_129 = arith.constant 0 : index
    %c0_130 = arith.constant 0 : index
    %298 = vector.load %arg8[%c1_128, %c0_129, %c0_130] : memref<2x1x32xf32, #tpu.memory_space<vmem>>, vector<1x1x32xf32>
    %299 = vector.shape_cast %298 : vector<1x1x32xf32> to vector<1x32xf32>
    %300 = vector.broadcast %299 : vector<1x32xf32> to vector<16x32xf32>
    %301 = arith.addf %297, %300 : vector<16x32xf32>
    %302 = arith.addf %177, %301 : vector<16x32xf32>
    %c1_131 = arith.constant 1 : index
    %c0_132 = arith.constant 0 : index
    %c0_133 = arith.constant 0 : index
    %303 = vector.load %arg9[%c1_131, %c0_132, %c0_133] : memref<2x1x32xf32, #tpu.memory_space<vmem>>, vector<1x1x32xf32>
    %304 = vector.shape_cast %303 : vector<1x1x32xf32> to vector<1x32xf32>
    %c1_134 = arith.constant 1 : index
    %c0_135 = arith.constant 0 : index
    %c0_136 = arith.constant 0 : index
    %305 = vector.load %arg10[%c1_134, %c0_135, %c0_136] : memref<2x1x32xf32, #tpu.memory_space<vmem>>, vector<1x1x32xf32>
    %306 = vector.shape_cast %305 : vector<1x1x32xf32> to vector<1x32xf32>
    %cst_137 = arith.constant dense<0.000000e+00> : vector<16xf32>
    %307 = vector.multi_reduction <add>, %302, %cst_137 [1] : vector<16x32xf32> to vector<16xf32>
    %308 = vector.shape_cast %307 : vector<16xf32> to vector<16x1xf32>
    %cst_138 = arith.constant 3.200000e+01 : f32
    %309 = vector.broadcast %cst_138 : f32 to vector<16x1xf32>
    %310 = arith.divf %308, %309 : vector<16x1xf32>
    %311 = vector.broadcast %310 : vector<16x1xf32> to vector<16x32xf32>
    %312 = arith.subf %302, %311 : vector<16x32xf32>
    %313 = arith.mulf %312, %312 : vector<16x32xf32>
    %cst_139 = arith.constant dense<0.000000e+00> : vector<16xf32>
    %314 = vector.multi_reduction <add>, %313, %cst_139 [1] : vector<16x32xf32> to vector<16xf32>
    %315 = vector.shape_cast %314 : vector<16xf32> to vector<16x1xf32>
    %cst_140 = arith.constant 3.200000e+01 : f32
    %316 = vector.broadcast %cst_140 : f32 to vector<16x1xf32>
    %317 = arith.divf %315, %316 : vector<16x1xf32>
    %318 = vector.broadcast %310 : vector<16x1xf32> to vector<16x32xf32>
    %319 = arith.subf %302, %318 : vector<16x32xf32>
    %cst_141 = arith.constant 9.99999974E-6 : f32
    %320 = vector.broadcast %cst_141 : f32 to vector<16x1xf32>
    %321 = arith.addf %317, %320 : vector<16x1xf32>
    %322 = math.rsqrt %321 : vector<16x1xf32>
    %323 = vector.broadcast %322 : vector<16x1xf32> to vector<16x32xf32>
    %324 = arith.mulf %319, %323 : vector<16x32xf32>
    %325 = vector.broadcast %304 : vector<1x32xf32> to vector<16x32xf32>
    %326 = arith.mulf %324, %325 : vector<16x32xf32>
    %327 = vector.broadcast %306 : vector<1x32xf32> to vector<16x32xf32>
    %328 = arith.addf %326, %327 : vector<16x32xf32>
    %c1_142 = arith.constant 1 : index
    %c0_143 = arith.constant 0 : index
    %c0_144 = arith.constant 0 : index
    %329 = vector.load %arg11[%c1_142, %c0_143, %c0_144] : memref<2x32x64xf32, #tpu.memory_space<vmem>>, vector<1x32x64xf32>
    %330 = vector.shape_cast %329 : vector<1x32x64xf32> to vector<32x64xf32>
    %cst_145 = arith.constant dense<0.000000e+00> : vector<16x64xf32>
    %331 = tpu.matmul %328, %330, %cst_145 {dimension_numbers = #tpu.dot_dimension_numbers<[1], [0], [0], [1], [0, 0, 1, 1], [], []>} : vector<16x32xf32>, vector<32x64xf32>, vector<16x64xf32> -> vector<16x64xf32>
    %c1_146 = arith.constant 1 : index
    %c0_147 = arith.constant 0 : index
    %c0_148 = arith.constant 0 : index
    %332 = vector.load %arg12[%c1_146, %c0_147, %c0_148] : memref<2x1x64xf32, #tpu.memory_space<vmem>>, vector<1x1x64xf32>
    %333 = vector.shape_cast %332 : vector<1x1x64xf32> to vector<1x64xf32>
    %334 = vector.broadcast %333 : vector<1x64xf32> to vector<16x64xf32>
    %335 = arith.addf %331, %334 : vector<16x64xf32>
    %cst_149 = arith.constant 0.000000e+00 : f32
    %336 = vector.broadcast %cst_149 : f32 to vector<16x64xf32>
    %337 = arith.maximumf %335, %336 : vector<16x64xf32>
    %c1_150 = arith.constant 1 : index
    %c0_151 = arith.constant 0 : index
    %c0_152 = arith.constant 0 : index
    %338 = vector.load %arg13[%c1_150, %c0_151, %c0_152] : memref<2x64x32xf32, #tpu.memory_space<vmem>>, vector<1x64x32xf32>
    %339 = vector.shape_cast %338 : vector<1x64x32xf32> to vector<64x32xf32>
    %cst_153 = arith.constant dense<0.000000e+00> : vector<16x32xf32>
    %340 = tpu.matmul %337, %339, %cst_153 {dimension_numbers = #tpu.dot_dimension_numbers<[1], [0], [0], [1], [0, 0, 1, 1], [], []>} : vector<16x64xf32>, vector<64x32xf32>, vector<16x32xf32> -> vector<16x32xf32>
    %c1_154 = arith.constant 1 : index
    %c0_155 = arith.constant 0 : index
    %c0_156 = arith.constant 0 : index
    %341 = vector.load %arg14[%c1_154, %c0_155, %c0_156] : memref<2x1x32xf32, #tpu.memory_space<vmem>>, vector<1x1x32xf32>
    %342 = vector.shape_cast %341 : vector<1x1x32xf32> to vector<1x32xf32>
    %343 = vector.broadcast %342 : vector<1x32xf32> to vector<16x32xf32>
    %344 = arith.addf %340, %343 : vector<16x32xf32>
    %345 = arith.addf %302, %344 : vector<16x32xf32>
    %c0_157 = arith.constant 0 : index
    %c0_158 = arith.constant 0 : index
    %346 = vector.load %arg15[%c0_157, %c0_158] : memref<1x32xf32, #tpu.memory_space<vmem>>, vector<1x32xf32>
    %c0_159 = arith.constant 0 : index
    %c0_160 = arith.constant 0 : index
    %347 = vector.load %arg16[%c0_159, %c0_160] : memref<1x32xf32, #tpu.memory_space<vmem>>, vector<1x32xf32>
    %cst_161 = arith.constant dense<0.000000e+00> : vector<16xf32>
    %348 = vector.multi_reduction <add>, %345, %cst_161 [1] : vector<16x32xf32> to vector<16xf32>
    %349 = vector.shape_cast %348 : vector<16xf32> to vector<16x1xf32>
    %cst_162 = arith.constant 3.200000e+01 : f32
    %350 = vector.broadcast %cst_162 : f32 to vector<16x1xf32>
    %351 = arith.divf %349, %350 : vector<16x1xf32>
    %352 = vector.broadcast %351 : vector<16x1xf32> to vector<16x32xf32>
    %353 = arith.subf %345, %352 : vector<16x32xf32>
    %354 = arith.mulf %353, %353 : vector<16x32xf32>
    %cst_163 = arith.constant dense<0.000000e+00> : vector<16xf32>
    %355 = vector.multi_reduction <add>, %354, %cst_163 [1] : vector<16x32xf32> to vector<16xf32>
    %356 = vector.shape_cast %355 : vector<16xf32> to vector<16x1xf32>
    %cst_164 = arith.constant 3.200000e+01 : f32
    %357 = vector.broadcast %cst_164 : f32 to vector<16x1xf32>
    %358 = arith.divf %356, %357 : vector<16x1xf32>
    %359 = vector.broadcast %351 : vector<16x1xf32> to vector<16x32xf32>
    %360 = arith.subf %345, %359 : vector<16x32xf32>
    %cst_165 = arith.constant 9.99999974E-6 : f32
    %361 = vector.broadcast %cst_165 : f32 to vector<16x1xf32>
    %362 = arith.addf %358, %361 : vector<16x1xf32>
    %363 = math.rsqrt %362 : vector<16x1xf32>
    %364 = vector.broadcast %363 : vector<16x1xf32> to vector<16x32xf32>
    %365 = arith.mulf %360, %364 : vector<16x32xf32>
    %366 = vector.broadcast %346 : vector<1x32xf32> to vector<16x32xf32>
    %367 = arith.mulf %365, %366 : vector<16x32xf32>
    %368 = vector.broadcast %347 : vector<1x32xf32> to vector<16x32xf32>
    %369 = arith.addf %367, %368 : vector<16x32xf32>
    %370 = vector.shape_cast %369 : vector<16x32xf32> to vector<2x8x32xf32>
    %c0_166 = arith.constant 0 : index
    %c0_167 = arith.constant 0 : index
    %c0_168 = arith.constant 0 : index
    %371 = vector.load %arg17[%c0_166, %c0_167, %c0_168] : memref<2x8x32xf32, #tpu.memory_space<vmem>>, vector<2x8x32xf32>
    tpu.vector_store %arg17[%c0_166, %c0_167, %c0_168], %370 {strides = array<i32>} : memref<2x8x32xf32, #tpu.memory_space<vmem>>, vector<2x8x32xf32>,
    return
  }
}

</mosaic_0001>

<llo_original>
// kernel: transformer_encoder_forward.1
$region0: #{transformer_encoder_forward.1}
  #allocation0 [shape = 'u32[]', space=smem, size = 0x4, offset = 0x4, fixed_abs, tag = 'smem constant byte address 0x4 - core index']
  #allocation1 [shape = 'u32[72,128]{1,0:T(1,128)}', space=vmem, size = 0x9000, scoped, tag = 'internal scratch']
  %s0 = inlined_call_operand.vmem [shape: f32[2,8,32], index: 0, kind: input, shape index: {}]
  %s1 = inlined_call_operand.vmem [shape: f32[2,1,8], index: 1, kind: input, shape index: {}]
  %s2 = inlined_call_operand.vmem [shape: f32[1,8,32], index: 2, kind: input, shape index: {}]
  %s3 = inlined_call_operand.vmem [shape: f32[2,1,32], index: 3, kind: input, shape index: {}]
  %s4 = inlined_call_operand.vmem [shape: f32[2,1,32], index: 4, kind: input, shape index: {}]
  %s5 = inlined_call_operand.vmem [shape: f32[2,32,96], index: 5, kind: input, shape index: {}]
  %s6 = inlined_call_operand.vmem [shape: f32[2,1,96], index: 6, kind: input, shape index: {}]
  %s7 = inlined_call_operand.vmem [shape: f32[2,32,32], index: 7, kind: input, shape index: {}]
  %s8 = inlined_call_operand.vmem [shape: f32[2,1,32], index: 8, kind: input, shape index: {}]
  %s9 = inlined_call_operand.vmem [shape: f32[2,1,32], index: 9, kind: input, shape index: {}]
  %s10 = inlined_call_operand.vmem [shape: f32[2,1,32], index: 10, kind: input, shape index: {}]
  %s11 = inlined_call_operand.vmem [shape: f32[2,32,64], index: 11, kind: input, shape index: {}]
  %s12 = inlined_call_operand.vmem [shape: f32[2,1,64], index: 12, kind: input, shape index: {}]
  %s13 = inlined_call_operand.vmem [shape: f32[2,64,32], index: 13, kind: input, shape index: {}]
  %s14 = inlined_call_operand.vmem [shape: f32[2,1,32], index: 14, kind: input, shape index: {}]
  %s15 = inlined_call_operand.vmem [shape: f32[1,32], index: 15, kind: input, shape index: {}]
  %s16 = inlined_call_operand.vmem [shape: f32[1,32], index: 16, kind: input, shape index: {}]
  %s17 = inlined_call_operand.hbm [shape: f32[2,8,32], index: 17, kind: output, shape index: {}]
  %s18 = sld [smem:[#allocation0]]
  $region78: #{transformer_encoder_forward.1} parent=0
    _
  %s20 = ssub.s32 1, %s18
  %s21 = scalar_select 0, %s20, %s18
  $region1: #{transformer_encoder_forward.1} parent=0
    #allocation2 [shape = 'u8[8192]{0}', space=vmem, size = 0x2000, scoped, tag = 'output window, operand 0, single buffered']
    #allocation3 [shape = 's32[1]{0}', space=sflag, size = 0x4, scoped, tag = 'scoped memory for transformer_encoder_forward.1']
    %22 = vsyncpa [#allocation3], 0
    // Predicated region
    $region2: #{transformer_encoder_forward.1} parent=1 // pred_check
      _
    $region3: #{transformer_encoder_forward.1} parent=1 // pred_check_branch
      %24 = sbr.rel (0) target = $region5
    $region4: #{transformer_encoder_forward.1} parent=1 // pred_region
      _
    $region5: #{transformer_encoder_forward.1} parent=1 // pred_fallthru
      _
    // Predicated region
    $region6: #{transformer_encoder_forward.1} parent=1 // pred_check
      _
    $region7: #{transformer_encoder_forward.1} parent=1 // pred_check_branch
      %26 = sbr.rel (0) target = $region9
    $region8: #{transformer_encoder_forward.1} parent=1 // pred_region
      _
    $region9: #{transformer_encoder_forward.1} parent=1 // pred_fallthru
      _
    // Predicated region
    $region10: #{transformer_encoder_forward.1} parent=1 // pred_check
      _
    $region11: #{transformer_encoder_forward.1} parent=1 // pred_check_branch
      %28 = sbr.rel (0) target = $region13
    $region12: #{transformer_encoder_forward.1} parent=1 // pred_region
      _
    $region13: #{transformer_encoder_forward.1} parent=1 // pred_fallthru
      _
    // Predicated region
    $region14: #{transformer_encoder_forward.1} parent=1 // pred_check
      _
    $region15: #{transformer_encoder_forward.1} parent=1 // pred_check_branch
      %30 = sbr.rel (0) target = $region17
    $region16: #{transformer_encoder_forward.1} parent=1 // pred_region
      _
    $region17: #{transformer_encoder_forward.1} parent=1 // pred_fallthru
      _
    // Predicated region
    $region18: #{transformer_encoder_forward.1} parent=1 // pred_check
      _
    $region19: #{transformer_encoder_forward.1} parent=1 // pred_check_branch
      %32 = sbr.rel (0) target = $region21
    $region20: #{transformer_encoder_forward.1} parent=1 // pred_region
      _
    $region21: #{transformer_encoder_forward.1} parent=1 // pred_fallthru
      _
    // Predicated region
    $region22: #{transformer_encoder_forward.1} parent=1 // pred_check
      _
    $region23: #{transformer_encoder_forward.1} parent=1 // pred_check_branch
      %34 = sbr.rel (0) target = $region25
    $region24: #{transformer_encoder_forward.1} parent=1 // pred_region
      _
    $region25: #{transformer_encoder_forward.1} parent=1 // pred_fallthru
      _
    // Predicated region
    $region26: #{transformer_encoder_forward.1} parent=1 // pred_check
      _
    $region27: #{transformer_encoder_forward.1} parent=1 // pred_check_branch
      %36 = sbr.rel (0) target = $region29
    $region28: #{transformer_encoder_forward.1} parent=1 // pred_region
      _
    $region29: #{transformer_encoder_forward.1} parent=1 // pred_fallthru
      _
    // Predicated region
    $region30: #{transformer_encoder_forward.1} parent=1 // pred_check
      _
    $region31: #{transformer_encoder_forward.1} parent=1 // pred_check_branch
      %38 = sbr.rel (0) target = $region33
    $region32: #{transformer_encoder_forward.1} parent=1 // pred_region
      _
    $region33: #{transformer_encoder_forward.1} parent=1 // pred_fallthru
      _
    // Predicated region
    $region34: #{transformer_encoder_forward.1} parent=1 // pred_check
      _
    $region35: #{transformer_encoder_forward.1} parent=1 // pred_check_branch
      %40 = sbr.rel (0) target = $region37
    $region36: #{transformer_encoder_forward.1} parent=1 // pred_region
      _
    $region37: #{transformer_encoder_forward.1} parent=1 // pred_fallthru
      _
    // Predicated region
    $region38: #{transformer_encoder_forward.1} parent=1 // pred_check
      _
    $region39: #{transformer_encoder_forward.1} parent=1 // pred_check_branch
      %42 = sbr.rel (0) target = $region41
    $region40: #{transformer_encoder_forward.1} parent=1 // pred_region
      _
    $region41: #{transformer_encoder_forward.1} parent=1 // pred_fallthru
      _
    // Predicated region
    $region42: #{transformer_encoder_forward.1} parent=1 // pred_check
      _
    $region43: #{transformer_encoder_forward.1} parent=1 // pred_check_branch
      %44 = sbr.rel (0) target = $region45
    $region44: #{transformer_encoder_forward.1} parent=1 // pred_region
      _
    $region45: #{transformer_encoder_forward.1} parent=1 // pred_fallthru
      _
    // Predicated region
    $region46: #{transformer_encoder_forward.1} parent=1 // pred_check
      _
    $region47: #{transformer_encoder_forward.1} parent=1 // pred_check_branch
      %46 = sbr.rel (0) target = $region49
    $region48: #{transformer_encoder_forward.1} parent=1 // pred_region
      _
    $region49: #{transformer_encoder_forward.1} parent=1 // pred_fallthru
      _
    // Predicated region
    $region50: #{transformer_encoder_forward.1} parent=1 // pred_check
      _
    $region51: #{transformer_encoder_forward.1} parent=1 // pred_check_branch
      %48 = sbr.rel (0) target = $region53
    $region52: #{transformer_encoder_forward.1} parent=1 // pred_region
      _
    $region53: #{transformer_encoder_forward.1} parent=1 // pred_fallthru
      _
    // Predicated region
    $region54: #{transformer_encoder_forward.1} parent=1 // pred_check
      _
    $region55: #{transformer_encoder_forward.1} parent=1 // pred_check_branch
      %50 = sbr.rel (0) target = $region57
    $region56: #{transformer_encoder_forward.1} parent=1 // pred_region
      _
    $region57: #{transformer_encoder_forward.1} parent=1 // pred_fallthru
      _
    // Predicated region
    $region58: #{transformer_encoder_forward.1} parent=1 // pred_check
      _
    $region59: #{transformer_encoder_forward.1} parent=1 // pred_check_branch
      %52 = sbr.rel (0) target = $region61
    $region60: #{transformer_encoder_forward.1} parent=1 // pred_region
      _
    $region61: #{transformer_encoder_forward.1} parent=1 // pred_fallthru
      _
    // Predicated region
    $region62: #{transformer_encoder_forward.1} parent=1 // pred_check
      _
    $region63: #{transformer_encoder_forward.1} parent=1 // pred_check_branch
      %54 = sbr.rel (0) target = $region65
    $region64: #{transformer_encoder_forward.1} parent=1 // pred_region
      _
    $region65: #{transformer_encoder_forward.1} parent=1 // pred_fallthru
      _
    // Predicated region
    $region66: #{transformer_encoder_forward.1} parent=1 // pred_check
      _
    $region67: #{transformer_encoder_forward.1} parent=1 // pred_check_branch
      %56 = sbr.rel (0) target = $region69
    $region68: #{transformer_encoder_forward.1} parent=1 // pred_region
      _
    $region69: #{transformer_encoder_forward.1} parent=1 // pred_fallthru
      _
    %v57 = vld [vmem:[%s0] sm:$0xff]
    %v58 = vld [vmem:[%s0 + $0x8] sm:$0xff]
    %v59 = vld [vmem:[%s2] sm:$0xff]
    %v60 = vadd.f32 %v57, %v59
    %v61 = vadd.f32 %v58, %v59
    %v62 = vld [vmem:[%s1] sm:$0x1]
    %v63 = vld [vmem:[%s1 + $0x1] sm:$0x1]
    %v66 = vperm.slane %v62, 0
    %v67 = vperm.slane %v63, 0
    %vm70 = vcmp.ne.f32.partialorder %v66, 0.0
    %vm71 = vcmp.ne.f32.partialorder %v67, 0.0
    %v72 = vld [vmem:[%s3] sm:$0x1]
    %v73 = vld [vmem:[%s4] sm:$0x1]
    %vm74 = vcmask 261120
    %v75 = vsel %vm74, %v60, 0.0
    %76 = vadd.xlane.f32.xlu0 %v75
    %v77 = vpop.xlane.xlu0 %76
    %v78 = vsel %vm74, %v61, 0.0
    %79 = vadd.xlane.f32.xlu0 %v78
    %v80 = vpop.xlane.xlu0 %79
    %v81 = vrcp.pop 32.0
    %v82 = vmul.f32 32.0, %v81
    %v83 = vsub.f32 1.0, %v82
    %v84 = vmul.f32 %v81, %v83
    %v85 = vadd.f32 %v81, %v84
    %vm86 = vweird.f32 %v81
    %v87 = vsel %vm86, %v81, %v85
    %v88 = vmul.f32 %v77, %v87
    %v89 = vmul.f32 %v80, %v87
    %v90 = vsub.f32 %v60, %v88
    %v91 = vsub.f32 %v61, %v89
    %v92 = vmul.f32 %v90, %v90
    %v93 = vmul.f32 %v91, %v91
    %v94 = vsel %vm74, %v92, 0.0
    %95 = vadd.xlane.f32.xlu0 %v94
    %v96 = vpop.xlane.xlu0 %95
    %v97 = vsel %vm74, %v93, 0.0
    %98 = vadd.xlane.f32.xlu0 %v97
    %v99 = vpop.xlane.xlu0 %98
    %v100 = vmul.f32 %v96, %v87
    %v101 = vmul.f32 %v99, %v87
    %v102 = vadd.f32 %v100, 1e-05
    %v103 = vadd.f32 %v101, 1e-05
    %v104 = vrsqrt.pop %v102
    %v105 = vmul.f32 %v104, %v102
    %v106 = vmul.f32 %v105, %v104
    %v107 = vmul.f32 0.5, %v106
    %v108 = vsub.f32 1.5, %v107
    %v109 = vmul.f32 %v104, %v108
    %vm110 = vweird.f32 %v102
    %vm111 = vweird.f32 %v104
    %vm112 = vmor %vm110, %vm111
    %v113 = vsel %vm112, %v104, %v109
    %v114 = vrsqrt.pop %v103
    %v115 = vmul.f32 %v114, %v103
    %v116 = vmul.f32 %v115, %v114
    %v117 = vmul.f32 0.5, %v116
    %v118 = vsub.f32 1.5, %v117
    %v119 = vmul.f32 %v114, %v118
    %vm120 = vweird.f32 %v103
    %vm121 = vweird.f32 %v114
    %vm122 = vmor %vm120, %vm121
    %v123 = vsel %vm122, %v114, %v119
    %v124 = vmul.f32 %v90, %v113
    %v125 = vmul.f32 %v91, %v123
    %v127 = vperm.slane %v72, 0
    %v129 = vmul.f32 %v124, %v127
    %v130 = vmul.f32 %v125, %v127
    %v132 = vperm.slane %v73, 0
    %v134 = vadd.f32 %v129, %v132
    %v135 = vadd.f32 %v130, %v132
    %v136 = vld [vmem:[%s5] sm:$0xff]
    %v137 = vld [vmem:[%s5 + $0x8] sm:$0xff]
    %v138 = vld [vmem:[%s5 + $0x10] sm:$0xff]
    %v139 = vld [vmem:[%s5 + $0x18] sm:$0xff]
    %v140 = vld [vmem:[%s6] sm:$0x1]
    %v142 = vperm.slane %v140, 0
    %v145 = vsel %vm74, %v134, 0
    %v148 = vsel %vm74, %v135, 0
    %150 = vmatpush.msra.mxu0 0.0
    %151 = vmatpush.msra.mxu0 0.0
    %152 = vmatpush.msra.mxu0 0.0
    %153 = vmatpush.msra.mxu0 0.0
    %154 = vmatpush.msra.mxu0 0.0
    %155 = vmatpush.msra.mxu0 0.0
    %156 = vmatpush.msra.mxu0 0.0
    %157 = vmatpush.msra.mxu0 0.0
    %158 = vmatpush.msra.mxu0 0.0
    %159 = vmatpush.msra.mxu0 0.0
    %160 = vmatpush.msra.mxu0 0.0
    %161 = vmatpush.msra.mxu0 0.0
    %162 = vmatpush.msra.mxu0 %v139
    %163 = vmatpush.msra.mxu0 %v138
    %164 = vmatpush.msra.mxu0 %v137
    %165 = vmatpush.msra.mxu0 %v136
    %166 = vmatmul.f32.gmra.mxu0 %v145
    %v167 = vpop.f32.mrf.mxu0
    %v168 = vadd.f32 %v142, %v167
    %169 = vmatmul.f32.gmra.mxu0 %v148
    %v170 = vpop.f32.mrf.mxu0
    %v171 = vadd.f32 %v142, %v170
    %172 = vdwg.mxu0
    %174 = vrot.lane.b32.xlu0 %v168, 96
    %v175 = vpop.permute.xlu0 %174
    %vm176 = vcmask 64512
    %v177 = vsel %vm176, %v168, 0
    %v179 = vsel %vm176, %v175, 0
    %181 = vmatpush.xpose.msra.mxu0 0.0
    %182 = vmatpush.xpose.msra.mxu0 0.0
    %183 = vmatpush.xpose.msra.mxu0 0.0
    %184 = vmatpush.xpose.msra.mxu0 0.0
    %185 = vmatpush.xpose.msra.mxu0 0.0
    %186 = vmatpush.xpose.msra.mxu0 0.0
    %187 = vmatpush.xpose.msra.mxu0 0.0
    %188 = vmatpush.xpose.msra.mxu0 0.0
    %189 = vmatpush.xpose.msra.mxu0 0.0
    %190 = vmatpush.xpose.msra.mxu0 0.0
    %191 = vmatpush.xpose.msra.mxu0 0.0
    %192 = vmatpush.xpose.msra.mxu0 0.0
    %193 = vmatpush.xpose.msra.mxu0 0.0
    %194 = vmatpush.xpose.msra.mxu0 0.0
    %195 = vmatpush.xpose.msra.mxu0 0.0
    %196 = vmatpush.xpose.msra.mxu0 %v179
    %197 = vmatmul.f32.gmra.mxu0 %v177
    %v198 = vpop.f32.mrf.mxu0
    %v199 = vadd.f32 0.0, %v198
    %200 = vdwg.mxu0
    %202 = vrot.lane.b32.xlu0 %v171, 96
    %v203 = vpop.permute.xlu0 %202
    %v204 = vsel %vm176, %v171, 0
    %v206 = vsel %vm176, %v203, 0
    %208 = vmatpush.xpose.msra.mxu0 0.0
    %209 = vmatpush.xpose.msra.mxu0 0.0
    %210 = vmatpush.xpose.msra.mxu0 0.0
    %211 = vmatpush.xpose.msra.mxu0 0.0
    %212 = vmatpush.xpose.msra.mxu0 0.0
    %213 = vmatpush.xpose.msra.mxu0 0.0
    %214 = vmatpush.xpose.msra.mxu0 0.0
    %215 = vmatpush.xpose.msra.mxu0 0.0
    %216 = vmatpush.xpose.msra.mxu0 0.0
    %217 = vmatpush.xpose.msra.mxu0 0.0
    %218 = vmatpush.xpose.msra.mxu0 0.0
    %219 = vmatpush.xpose.msra.mxu0 0.0
    %220 = vmatpush.xpose.msra.mxu0 0.0
    %221 = vmatpush.xpose.msra.mxu0 0.0
    %222 = vmatpush.xpose.msra.mxu0 0.0
    %223 = vmatpush.xpose.msra.mxu0 %v206
    %224 = vmatmul.f32.gmra.mxu0 %v204
    %v225 = vpop.f32.mrf.mxu0
    %v226 = vadd.f32 0.0, %v225
    %227 = vdwg.mxu0
    %v228 = vmul.f32 %v199, 0.35355338
    %v229 = vmul.f32 %v226, 0.35355338
    %v230 = vsel %vm70, %v228, -1e+09
    %v231 = vsel %vm71, %v229, -1e+09
    %v232 = vsel %vm176, %v230, -inf
    %233 = vmax.xlane.f32.xlu0 %v232
    %v234 = vpop.xlane.xlu0 %233
    %v235 = vsel %vm176, %v231, -inf
    %236 = vmax.xlane.f32.xlu0 %v235
    %v237 = vpop.xlane.xlu0 %236
    %v238 = vsub.f32 %v230, %v234
    %v239 = vsub.f32 %v231, %v237
    %v240 = vmul.f32 %v238, 1.442695
    %v241 = vpow.pop %v240
    %v242 = vmul.f32 %v239, 1.442695
    %v243 = vpow.pop %v242
    %v244 = vsel %vm176, %v241, 0.0
    %245 = vadd.xlane.f32.xlu0 %v244
    %v246 = vpop.xlane.xlu0 %245
    %v247 = vsel %vm176, %v243, 0.0
    %248 = vadd.xlane.f32.xlu0 %v247
    %v249 = vpop.xlane.xlu0 %248
    %v250 = vrcp.pop %v246
    %v251 = vrcp.pop %v249
    %v252 = vmul.f32 %v241, %v250
    %v253 = vmul.f32 %v243, %v251
    %254 = vrot.lane.b32.xlu0 %v168, 64
    %v255 = vpop.permute.xlu0 %254
    %v258 = vsel %vm176, %v252, 0
    %260 = vmatpush.msra.mxu0 0.0
    %261 = vmatpush.msra.mxu0 0.0
    %262 = vmatpush.msra.mxu0 0.0
    %263 = vmatpush.msra.mxu0 0.0
    %264 = vmatpush.msra.mxu0 0.0
    %265 = vmatpush.msra.mxu0 0.0
    %266 = vmatpush.msra.mxu0 0.0
    %267 = vmatpush.msra.mxu0 0.0
    %268 = vmatpush.msra.mxu0 0.0
    %269 = vmatpush.msra.mxu0 0.0
    %270 = vmatpush.msra.mxu0 0.0
    %271 = vmatpush.msra.mxu0 0.0
    %272 = vmatpush.msra.mxu0 0.0
    %273 = vmatpush.msra.mxu0 0.0
    %274 = vmatpush.msra.mxu0 0.0
    %275 = vmatpush.msra.mxu0 %v255
    %276 = vmatmul.f32.gmra.mxu0 %v258
    %v277 = vpop.f32.mrf.mxu0
    %v278 = vadd.f32 0.0, %v277
    %279 = vdwg.mxu0
    %280 = vrot.lane.b32.xlu0 %v171, 64
    %v281 = vpop.permute.xlu0 %280
    %v284 = vsel %vm176, %v253, 0
    %286 = vmatpush.msra.mxu0 0.0
    %287 = vmatpush.msra.mxu0 0.0
    %288 = vmatpush.msra.mxu0 0.0
    %289 = vmatpush.msra.mxu0 0.0
    %290 = vmatpush.msra.mxu0 0.0
    %291 = vmatpush.msra.mxu0 0.0
    %292 = vmatpush.msra.mxu0 0.0
    %293 = vmatpush.msra.mxu0 0.0
    %294 = vmatpush.msra.mxu0 0.0
    %295 = vmatpush.msra.mxu0 0.0
    %296 = vmatpush.msra.mxu0 0.0
    %297 = vmatpush.msra.mxu0 0.0
    %298 = vmatpush.msra.mxu0 0.0
    %299 = vmatpush.msra.mxu0 0.0
    %300 = vmatpush.msra.mxu0 0.0
    %301 = vmatpush.msra.mxu0 %v281
    %302 = vmatmul.f32.gmra.mxu0 %v284
    %v303 = vpop.f32.mrf.mxu0
    %v304 = vadd.f32 0.0, %v303
    %305 = vdwg.mxu0
    %306 = vrot.lane.b32.xlu0 %v168, 120
    %v307 = vpop.permute.xlu0 %306
    %308 = vrot.lane.b32.xlu0 %v168, 88
    %v309 = vpop.permute.xlu0 %308
    %v310 = vsel %vm176, %v307, 0
    %v312 = vsel %vm176, %v309, 0
    %314 = vmatpush.xpose.msra.mxu0 0.0
    %315 = vmatpush.xpose.msra.mxu0 0.0
    %316 = vmatpush.xpose.msra.mxu0 0.0
    %317 = vmatpush.xpose.msra.mxu0 0.0
    %318 = vmatpush.xpose.msra.mxu0 0.0
    %319 = vmatpush.xpose.msra.mxu0 0.0
    %320 = vmatpush.xpose.msra.mxu0 0.0
    %321 = vmatpush.xpose.msra.mxu0 0.0
    %322 = vmatpush.xpose.msra.mxu0 0.0
    %323 = vmatpush.xpose.msra.mxu0 0.0
    %324 = vmatpush.xpose.msra.mxu0 0.0
    %325 = vmatpush.xpose.msra.mxu0 0.0
    %326 = vmatpush.xpose.msra.mxu0 0.0
    %327 = vmatpush.xpose.msra.mxu0 0.0
    %328 = vmatpush.xpose.msra.mxu0 0.0
    %329 = vmatpush.xpose.msra.mxu0 %v312
    %330 = vmatmul.f32.gmra.mxu0 %v310
    %v331 = vpop.f32.mrf.mxu0
    %v332 = vadd.f32 0.0, %v331
    %333 = vdwg.mxu0
    %334 = vrot.lane.b32.xlu0 %v171, 120
    %v335 = vpop.permute.xlu0 %334
    %336 = vrot.lane.b32.xlu0 %v171, 88
    %v337 = vpop.permute.xlu0 %336
    %v338 = vsel %vm176, %v335, 0
    %v340 = vsel %vm176, %v337, 0
    %342 = vmatpush.xpose.msra.mxu0 0.0
    %343 = vmatpush.xpose.msra.mxu0 0.0
    %344 = vmatpush.xpose.msra.mxu0 0.0
    %345 = vmatpush.xpose.msra.mxu0 0.0
    %346 = vmatpush.xpose.msra.mxu0 0.0
    %347 = vmatpush.xpose.msra.mxu0 0.0
    %348 = vmatpush.xpose.msra.mxu0 0.0
    %349 = vmatpush.xpose.msra.mxu0 0.0
    %350 = vmatpush.xpose.msra.mxu0 0.0
    %351 = vmatpush.xpose.msra.mxu0 0.0
    %352 = vmatpush.xpose.msra.mxu0 0.0
    %353 = vmatpush.xpose.msra.mxu0 0.0
    %354 = vmatpush.xpose.msra.mxu0 0.0
    %355 = vmatpush.xpose.msra.mxu0 0.0
    %356 = vmatpush.xpose.msra.mxu0 0.0
    %357 = vmatpush.xpose.msra.mxu0 %v340
    %358 = vmatmul.f32.gmra.mxu0 %v338
    %v359 = vpop.f32.mrf.mxu0
    %v360 = vadd.f32 0.0, %v359
    %361 = vdwg.mxu0
    %v362 = vmul.f32 %v332, 0.35355338
    %v363 = vmul.f32 %v360, 0.35355338
    %v364 = vsel %vm70, %v362, -1e+09
    %v365 = vsel %vm71, %v363, -1e+09
    %v366 = vsel %vm176, %v364, -inf
    %367 = vmax.xlane.f32.xlu0 %v366
    %v368 = vpop.xlane.xlu0 %367
    %v369 = vsel %vm176, %v365, -inf
    %370 = vmax.xlane.f32.xlu0 %v369
    %v371 = vpop.xlane.xlu0 %370
    %v372 = vsub.f32 %v364, %v368
    %v373 = vsub.f32 %v365, %v371
    %v374 = vmul.f32 %v372, 1.442695
    %v375 = vpow.pop %v374
    %v376 = vmul.f32 %v373, 1.442695
    %v377 = vpow.pop %v376
    %v378 = vsel %vm176, %v375, 0.0
    %379 = vadd.xlane.f32.xlu0 %v378
    %v380 = vpop.xlane.xlu0 %379
    %v381 = vsel %vm176, %v377, 0.0
    %382 = vadd.xlane.f32.xlu0 %v381
    %v383 = vpop.xlane.xlu0 %382
    %v384 = vrcp.pop %v380
    %v385 = vrcp.pop %v383
    %v386 = vmul.f32 %v375, %v384
    %v387 = vmul.f32 %v377, %v385
    %388 = vrot.lane.b32.xlu0 %v168, 56
    %v389 = vpop.permute.xlu0 %388
    %v392 = vsel %vm176, %v386, 0
    %394 = vmatpush.msra.mxu0 0.0
    %395 = vmatpush.msra.mxu0 0.0
    %396 = vmatpush.msra.mxu0 0.0
    %397 = vmatpush.msra.mxu0 0.0
    %398 = vmatpush.msra.mxu0 0.0
    %399 = vmatpush.msra.mxu0 0.0
    %400 = vmatpush.msra.mxu0 0.0
    %401 = vmatpush.msra.mxu0 0.0
    %402 = vmatpush.msra.mxu0 0.0
    %403 = vmatpush.msra.mxu0 0.0
    %404 = vmatpush.msra.mxu0 0.0
    %405 = vmatpush.msra.mxu0 0.0
    %406 = vmatpush.msra.mxu0 0.0
    %407 = vmatpush.msra.mxu0 0.0
    %408 = vmatpush.msra.mxu0 0.0
    %409 = vmatpush.msra.mxu0 %v389
    %410 = vmatmul.f32.gmra.mxu0 %v392
    %v411 = vpop.f32.mrf.mxu0
    %v412 = vadd.f32 0.0, %v411
    %413 = vdwg.mxu0
    %414 = vrot.lane.b32.xlu0 %v171, 56
    %v415 = vpop.permute.xlu0 %414
    %v418 = vsel %vm176, %v387, 0
    %420 = vmatpush.msra.mxu0 0.0
    %421 = vmatpush.msra.mxu0 0.0
    %422 = vmatpush.msra.mxu0 0.0
    %423 = vmatpush.msra.mxu0 0.0
    %424 = vmatpush.msra.mxu0 0.0
    %425 = vmatpush.msra.mxu0 0.0
    %426 = vmatpush.msra.mxu0 0.0
    %427 = vmatpush.msra.mxu0 0.0
    %428 = vmatpush.msra.mxu0 0.0
    %429 = vmatpush.msra.mxu0 0.0
    %430 = vmatpush.msra.mxu0 0.0
    %431 = vmatpush.msra.mxu0 0.0
    %432 = vmatpush.msra.mxu0 0.0
    %433 = vmatpush.msra.mxu0 0.0
    %434 = vmatpush.msra.mxu0 0.0
    %435 = vmatpush.msra.mxu0 %v415
    %436 = vmatmul.f32.gmra.mxu0 %v418
    %v437 = vpop.f32.mrf.mxu0
    %v438 = vadd.f32 0.0, %v437
    %439 = vdwg.mxu0
    %440 = vrot.lane.b32.xlu0 %v168, 112
    %v441 = vpop.permute.xlu0 %440
    %442 = vrot.lane.b32.xlu0 %v168, 80
    %v443 = vpop.permute.xlu0 %442
    %v444 = vsel %vm176, %v441, 0
    %v446 = vsel %vm176, %v443, 0
    %448 = vmatpush.xpose.msra.mxu0 0.0
    %449 = vmatpush.xpose.msra.mxu0 0.0
    %450 = vmatpush.xpose.msra.mxu0 0.0
    %451 = vmatpush.xpose.msra.mxu0 0.0
    %452 = vmatpush.xpose.msra.mxu0 0.0
    %453 = vmatpush.xpose.msra.mxu0 0.0
    %454 = vmatpush.xpose.msra.mxu0 0.0
    %455 = vmatpush.xpose.msra.mxu0 0.0
    %456 = vmatpush.xpose.msra.mxu0 0.0
    %457 = vmatpush.xpose.msra.mxu0 0.0
    %458 = vmatpush.xpose.msra.mxu0 0.0
    %459 = vmatpush.xpose.msra.mxu0 0.0
    %460 = vmatpush.xpose.msra.mxu0 0.0
    %461 = vmatpush.xpose.msra.mxu0 0.0
    %462 = vmatpush.xpose.msra.mxu0 0.0
    %463 = vmatpush.xpose.msra.mxu0 %v446
    %464 = vmatmul.f32.gmra.mxu0 %v444
    %v465 = vpop.f32.mrf.mxu0
    %v466 = vadd.f32 0.0, %v465
    %467 = vdwg.mxu0
    %468 = vrot.lane.b32.xlu0 %v171, 112
    %v469 = vpop.permute.xlu0 %468
    %470 = vrot.lane.b32.xlu0 %v171, 80
    %v471 = vpop.permute.xlu0 %470
    %v472 = vsel %vm176, %v469, 0
    %v474 = vsel %vm176, %v471, 0
    %476 = vmatpush.xpose.msra.mxu0 0.0
    %477 = vmatpush.xpose.msra.mxu0 0.0
    %478 = vmatpush.xpose.msra.mxu0 0.0
    %479 = vmatpush.xpose.msra.mxu0 0.0
    %480 = vmatpush.xpose.msra.mxu0 0.0
    %481 = vmatpush.xpose.msra.mxu0 0.0
    %482 = vmatpush.xpose.msra.mxu0 0.0
    %483 = vmatpush.xpose.msra.mxu0 0.0
    %484 = vmatpush.xpose.msra.mxu0 0.0
    %485 = vmatpush.xpose.msra.mxu0 0.0
    %486 = vmatpush.xpose.msra.mxu0 0.0
    %487 = vmatpush.xpose.msra.mxu0 0.0
    %488 = vmatpush.xpose.msra.mxu0 0.0
    %489 = vmatpush.xpose.msra.mxu0 0.0
    %490 = vmatpush.xpose.msra.mxu0 0.0
    %491 = vmatpush.xpose.msra.mxu0 %v474
    %492 = vmatmul.f32.gmra.mxu0 %v472
    %v493 = vpop.f32.mrf.mxu0
    %v494 = vadd.f32 0.0, %v493
    %495 = vdwg.mxu0
    %v496 = vmul.f32 %v466, 0.35355338
    %v497 = vmul.f32 %v494, 0.35355338
    %v498 = vsel %vm70, %v496, -1e+09
    %v499 = vsel %vm71, %v497, -1e+09
    %v500 = vsel %vm176, %v498, -inf
    %501 = vmax.xlane.f32.xlu0 %v500
    %v502 = vpop.xlane.xlu0 %501
    %v503 = vsel %vm176, %v499, -inf
    %504 = vmax.xlane.f32.xlu0 %v503
    %v505 = vpop.xlane.xlu0 %504
    %v506 = vsub.f32 %v498, %v502
    %v507 = vsub.f32 %v499, %v505
    %v508 = vmul.f32 %v506, 1.442695
    %v509 = vpow.pop %v508
    %v510 = vmul.f32 %v507, 1.442695
    %v511 = vpow.pop %v510
    %v512 = vsel %vm176, %v509, 0.0
    %513 = vadd.xlane.f32.xlu0 %v512
    %v514 = vpop.xlane.xlu0 %513
    %v515 = vsel %vm176, %v511, 0.0
    %516 = vadd.xlane.f32.xlu0 %v515
    %v517 = vpop.xlane.xlu0 %516
    %v518 = vrcp.pop %v514
    %v519 = vrcp.pop %v517
    %v520 = vmul.f32 %v509, %v518
    %v521 = vmul.f32 %v511, %v519
    %522 = vrot.lane.b32.xlu0 %v168, 48
    %v523 = vpop.permute.xlu0 %522
    %v526 = vsel %vm176, %v520, 0
    %528 = vmatpush.msra.mxu0 0.0
    %529 = vmatpush.msra.mxu0 0.0
    %530 = vmatpush.msra.mxu0 0.0
    %531 = vmatpush.msra.mxu0 0.0
    %532 = vmatpush.msra.mxu0 0.0
    %533 = vmatpush.msra.mxu0 0.0
    %534 = vmatpush.msra.mxu0 0.0
    %535 = vmatpush.msra.mxu0 0.0
    %536 = vmatpush.msra.mxu0 0.0
    %537 = vmatpush.msra.mxu0 0.0
    %538 = vmatpush.msra.mxu0 0.0
    %539 = vmatpush.msra.mxu0 0.0
    %540 = vmatpush.msra.mxu0 0.0
    %541 = vmatpush.msra.mxu0 0.0
    %542 = vmatpush.msra.mxu0 0.0
    %543 = vmatpush.msra.mxu0 %v523
    %544 = vmatmul.f32.gmra.mxu0 %v526
    %v545 = vpop.f32.mrf.mxu0
    %v546 = vadd.f32 0.0, %v545
    %547 = vdwg.mxu0
    %548 = vrot.lane.b32.xlu0 %v171, 48
    %v549 = vpop.permute.xlu0 %548
    %v552 = vsel %vm176, %v521, 0
    %554 = vmatpush.msra.mxu0 0.0
    %555 = vmatpush.msra.mxu0 0.0
    %556 = vmatpush.msra.mxu0 0.0
    %557 = vmatpush.msra.mxu0 0.0
    %558 = vmatpush.msra.mxu0 0.0
    %559 = vmatpush.msra.mxu0 0.0
    %560 = vmatpush.msra.mxu0 0.0
    %561 = vmatpush.msra.mxu0 0.0
    %562 = vmatpush.msra.mxu0 0.0
    %563 = vmatpush.msra.mxu0 0.0
    %564 = vmatpush.msra.mxu0 0.0
    %565 = vmatpush.msra.mxu0 0.0
    %566 = vmatpush.msra.mxu0 0.0
    %567 = vmatpush.msra.mxu0 0.0
    %568 = vmatpush.msra.mxu0 0.0
    %569 = vmatpush.msra.mxu0 %v549
    %570 = vmatmul.f32.gmra.mxu0 %v552
    %v571 = vpop.f32.mrf.mxu0
    %v572 = vadd.f32 0.0, %v571
    %573 = vdwg.mxu0
    %574 = vrot.lane.b32.xlu0 %v168, 104
    %v575 = vpop.permute.xlu0 %574
    %576 = vrot.lane.b32.xlu0 %v168, 72
    %v577 = vpop.permute.xlu0 %576
    %v578 = vsel %vm176, %v575, 0
    %v580 = vsel %vm176, %v577, 0
    %582 = vmatpush.xpose.msra.mxu0 0.0
    %583 = vmatpush.xpose.msra.mxu0 0.0
    %584 = vmatpush.xpose.msra.mxu0 0.0
    %585 = vmatpush.xpose.msra.mxu0 0.0
    %586 = vmatpush.xpose.msra.mxu0 0.0
    %587 = vmatpush.xpose.msra.mxu0 0.0
    %588 = vmatpush.xpose.msra.mxu0 0.0
    %589 = vmatpush.xpose.msra.mxu0 0.0
    %590 = vmatpush.xpose.msra.mxu0 0.0
    %591 = vmatpush.xpose.msra.mxu0 0.0
    %592 = vmatpush.xpose.msra.mxu0 0.0
    %593 = vmatpush.xpose.msra.mxu0 0.0
    %594 = vmatpush.xpose.msra.mxu0 0.0
    %595 = vmatpush.xpose.msra.mxu0 0.0
    %596 = vmatpush.xpose.msra.mxu0 0.0
    %597 = vmatpush.xpose.msra.mxu0 %v580
    %598 = vmatmul.f32.gmra.mxu0 %v578
    %v599 = vpop.f32.mrf.mxu0
    %v600 = vadd.f32 0.0, %v599
    %601 = vdwg.mxu0
    %602 = vrot.lane.b32.xlu0 %v171, 104
    %v603 = vpop.permute.xlu0 %602
    %604 = vrot.lane.b32.xlu0 %v171, 72
    %v605 = vpop.permute.xlu0 %604
    %v606 = vsel %vm176, %v603, 0
    %v608 = vsel %vm176, %v605, 0
    %610 = vmatpush.xpose.msra.mxu0 0.0
    %611 = vmatpush.xpose.msra.mxu0 0.0
    %612 = vmatpush.xpose.msra.mxu0 0.0
    %613 = vmatpush.xpose.msra.mxu0 0.0
    %614 = vmatpush.xpose.msra.mxu0 0.0
    %615 = vmatpush.xpose.msra.mxu0 0.0
    %616 = vmatpush.xpose.msra.mxu0 0.0
    %617 = vmatpush.xpose.msra.mxu0 0.0
    %618 = vmatpush.xpose.msra.mxu0 0.0
    %619 = vmatpush.xpose.msra.mxu0 0.0
    %620 = vmatpush.xpose.msra.mxu0 0.0
    %621 = vmatpush.xpose.msra.mxu0 0.0
    %622 = vmatpush.xpose.msra.mxu0 0.0
    %623 = vmatpush.xpose.msra.mxu0 0.0
    %624 = vmatpush.xpose.msra.mxu0 0.0
    %625 = vmatpush.xpose.msra.mxu0 %v608
    %626 = vmatmul.f32.gmra.mxu0 %v606
    %v627 = vpop.f32.mrf.mxu0
    %v628 = vadd.f32 0.0, %v627
    %629 = vdwg.mxu0
    %v630 = vmul.f32 %v600, 0.35355338
    %v631 = vmul.f32 %v628, 0.35355338
    %v632 = vsel %vm70, %v630, -1e+09
    %v633 = vsel %vm71, %v631, -1e+09
    %v634 = vsel %vm176, %v632, -inf
    %635 = vmax.xlane.f32.xlu0 %v634
    %v636 = vpop.xlane.xlu0 %635
    %v637 = vsel %vm176, %v633, -inf
    %638 = vmax.xlane.f32.xlu0 %v637
    %v639 = vpop.xlane.xlu0 %638
    %v640 = vsub.f32 %v632, %v636
    %v641 = vsub.f32 %v633, %v639
    %v642 = vmul.f32 %v640, 1.442695
    %v643 = vpow.pop %v642
    %v644 = vmul.f32 %v641, 1.442695
    %v645 = vpow.pop %v644
    %v646 = vsel %vm176, %v643, 0.0
    %647 = vadd.xlane.f32.xlu0 %v646
    %v648 = vpop.xlane.xlu0 %647
    %v649 = vsel %vm176, %v645, 0.0
    %650 = vadd.xlane.f32.xlu0 %v649
    %v651 = vpop.xlane.xlu0 %650
    %v652 = vrcp.pop %v648
    %v653 = vrcp.pop %v651
    %v654 = vmul.f32 %v643, %v652
    %v655 = vmul.f32 %v645, %v653
    %656 = vrot.lane.b32.xlu0 %v168, 40
    %v657 = vpop.permute.xlu0 %656
    %v660 = vsel %vm176, %v654, 0
    %662 = vmatpush.msra.mxu0 0.0
    %663 = vmatpush.msra.mxu0 0.0
    %664 = vmatpush.msra.mxu0 0.0
    %665 = vmatpush.msra.mxu0 0.0
    %666 = vmatpush.msra.mxu0 0.0
    %667 = vmatpush.msra.mxu0 0.0
    %668 = vmatpush.msra.mxu0 0.0
    %669 = vmatpush.msra.mxu0 0.0
    %670 = vmatpush.msra.mxu0 0.0
    %671 = vmatpush.msra.mxu0 0.0
    %672 = vmatpush.msra.mxu0 0.0
    %673 = vmatpush.msra.mxu0 0.0
    %674 = vmatpush.msra.mxu0 0.0
    %675 = vmatpush.msra.mxu0 0.0
    %676 = vmatpush.msra.mxu0 0.0
    %677 = vmatpush.msra.mxu0 %v657
    %678 = vmatmul.f32.gmra.mxu0 %v660
    %v679 = vpop.f32.mrf.mxu0
    %v680 = vadd.f32 0.0, %v679
    %681 = vdwg.mxu0
    %682 = vrot.lane.b32.xlu0 %v171, 40
    %v683 = vpop.permute.xlu0 %682
    %v686 = vsel %vm176, %v655, 0
    %688 = vmatpush.msra.mxu0 0.0
    %689 = vmatpush.msra.mxu0 0.0
    %690 = vmatpush.msra.mxu0 0.0
    %691 = vmatpush.msra.mxu0 0.0
    %692 = vmatpush.msra.mxu0 0.0
    %693 = vmatpush.msra.mxu0 0.0
    %694 = vmatpush.msra.mxu0 0.0
    %695 = vmatpush.msra.mxu0 0.0
    %696 = vmatpush.msra.mxu0 0.0
    %697 = vmatpush.msra.mxu0 0.0
    %698 = vmatpush.msra.mxu0 0.0
    %699 = vmatpush.msra.mxu0 0.0
    %700 = vmatpush.msra.mxu0 0.0
    %701 = vmatpush.msra.mxu0 0.0
    %702 = vmatpush.msra.mxu0 0.0
    %703 = vmatpush.msra.mxu0 %v683
    %704 = vmatmul.f32.gmra.mxu0 %v686
    %v705 = vpop.f32.mrf.mxu0
    %v706 = vadd.f32 0.0, %v705
    %707 = vdwg.mxu0
    %710 = vrot.lane.b32.xlu0 %v412, 8
    %v711 = vpop.permute.xlu0 %710
    %712 = vrot.lane.b32.xlu0 %v438, 8
    %v713 = vpop.permute.xlu0 %712
    %718 = vrot.lane.b32.xlu0 %v546, 16
    %v719 = vpop.permute.xlu0 %718
    %720 = vrot.lane.b32.xlu0 %v572, 16
    %v721 = vpop.permute.xlu0 %720
    %726 = vrot.lane.b32.xlu0 %v680, 24
    %v727 = vpop.permute.xlu0 %726
    %728 = vrot.lane.b32.xlu0 %v706, 24
    %v729 = vpop.permute.xlu0 %728
    %v732 = vsel %vm176, %v278, %v711
    %v733 = vsel %vm176, %v304, %v713
    %vm734 = vcmask 130048
    %v735 = vsel %vm734, %v732, %v719
    %v736 = vsel %vm734, %v733, %v721
    %vm737 = vcmask 195584
    %v738 = vsel %vm737, %v735, %v727
    %v739 = vsel %vm737, %v736, %v729
    %v740 = vld [vmem:[%s7] sm:$0xff]
    %v741 = vld [vmem:[%s7 + $0x8] sm:$0xff]
    %v742 = vld [vmem:[%s7 + $0x10] sm:$0xff]
    %v743 = vld [vmem:[%s7 + $0x18] sm:$0xff]
    %v744 = vld [vmem:[%s8] sm:$0x1]
    %v746 = vperm.slane %v744, 0
    %v749 = vsel %vm74, %v738, 0
    %v752 = vsel %vm74, %v739, 0
    %754 = vmatpush.msra.mxu0 0.0
    %755 = vmatpush.msra.mxu0 0.0
    %756 = vmatpush.msra.mxu0 0.0
    %757 = vmatpush.msra.mxu0 0.0
    %758 = vmatpush.msra.mxu0 0.0
    %759 = vmatpush.msra.mxu0 0.0
    %760 = vmatpush.msra.mxu0 0.0
    %761 = vmatpush.msra.mxu0 0.0
    %762 = vmatpush.msra.mxu0 0.0
    %763 = vmatpush.msra.mxu0 0.0
    %764 = vmatpush.msra.mxu0 0.0
    %765 = vmatpush.msra.mxu0 0.0
    %766 = vmatpush.msra.mxu0 %v743
    %767 = vmatpush.msra.mxu0 %v742
    %768 = vmatpush.msra.mxu0 %v741
    %769 = vmatpush.msra.mxu0 %v740
    %770 = vmatmul.f32.gmra.mxu0 %v749
    %v771 = vpop.f32.mrf.mxu0
    %v772 = vadd.f32 %v746, %v771
    %773 = vmatmul.f32.gmra.mxu0 %v752
    %v774 = vpop.f32.mrf.mxu0
    %v775 = vadd.f32 %v746, %v774
    %776 = vdwg.mxu0
    %v777 = vadd.f32 %v60, %v772
    %v778 = vadd.f32 %v61, %v775
    %v779 = vld [vmem:[%s9] sm:$0x1]
    %v780 = vld [vmem:[%s10] sm:$0x1]
    %v781 = vsel %vm74, %v777, 0.0
    %782 = vadd.xlane.f32.xlu0 %v781
    %v783 = vpop.xlane.xlu0 %782
    %v784 = vsel %vm74, %v778, 0.0
    %785 = vadd.xlane.f32.xlu0 %v784
    %v786 = vpop.xlane.xlu0 %785
    %v787 = vmul.f32 %v783, %v87
    %v788 = vmul.f32 %v786, %v87
    %v789 = vsub.f32 %v777, %v787
    %v790 = vsub.f32 %v778, %v788
    %v791 = vmul.f32 %v789, %v789
    %v792 = vmul.f32 %v790, %v790
    %v793 = vsel %vm74, %v791, 0.0
    %794 = vadd.xlane.f32.xlu0 %v793
    %v795 = vpop.xlane.xlu0 %794
    %v796 = vsel %vm74, %v792, 0.0
    %797 = vadd.xlane.f32.xlu0 %v796
    %v798 = vpop.xlane.xlu0 %797
    %v799 = vmul.f32 %v795, %v87
    %v800 = vmul.f32 %v798, %v87
    %v801 = vadd.f32 %v799, 1e-05
    %v802 = vadd.f32 %v800, 1e-05
    %v803 = vrsqrt.pop %v801
    %v804 = vmul.f32 %v803, %v801
    %v805 = vmul.f32 %v804, %v803
    %v806 = vmul.f32 0.5, %v805
    %v807 = vsub.f32 1.5, %v806
    %v808 = vmul.f32 %v803, %v807
    %vm809 = vweird.f32 %v801
    %vm810 = vweird.f32 %v803
    %vm811 = vmor %vm809, %vm810
    %v812 = vsel %vm811, %v803, %v808
    %v813 = vrsqrt.pop %v802
    %v814 = vmul.f32 %v813, %v802
    %v815 = vmul.f32 %v814, %v813
    %v816 = vmul.f32 0.5, %v815
    %v817 = vsub.f32 1.5, %v816
    %v818 = vmul.f32 %v813, %v817
    %vm819 = vweird.f32 %v802
    %vm820 = vweird.f32 %v813
    %vm821 = vmor %vm819, %vm820
    %v822 = vsel %vm821, %v813, %v818
    %v823 = vmul.f32 %v789, %v812
    %v824 = vmul.f32 %v790, %v822
    %v826 = vperm.slane %v779, 0
    %v828 = vmul.f32 %v823, %v826
    %v829 = vmul.f32 %v824, %v826
    %v831 = vperm.slane %v780, 0
    %v833 = vadd.f32 %v828, %v831
    %v834 = vadd.f32 %v829, %v831
    %v835 = vld [vmem:[%s11] sm:$0xff]
    %v836 = vld [vmem:[%s11 + $0x8] sm:$0xff]
    %v837 = vld [vmem:[%s11 + $0x10] sm:$0xff]
    %v838 = vld [vmem:[%s11 + $0x18] sm:$0xff]
    %v839 = vld [vmem:[%s12] sm:$0x1]
    %v841 = vperm.slane %v839, 0
    %v844 = vsel %vm74, %v833, 0
    %v847 = vsel %vm74, %v834, 0
    %849 = vmatpush.msra.mxu0 0.0
    %850 = vmatpush.msra.mxu0 0.0
    %851 = vmatpush.msra.mxu0 0.0
    %852 = vmatpush.msra.mxu0 0.0
    %853 = vmatpush.msra.mxu0 0.0
    %854 = vmatpush.msra.mxu0 0.0
    %855 = vmatpush.msra.mxu0 0.0
    %856 = vmatpush.msra.mxu0 0.0
    %857 = vmatpush.msra.mxu0 0.0
    %858 = vmatpush.msra.mxu0 0.0
    %859 = vmatpush.msra.mxu0 0.0
    %860 = vmatpush.msra.mxu0 0.0
    %861 = vmatpush.msra.mxu0 %v838
    %862 = vmatpush.msra.mxu0 %v837
    %863 = vmatpush.msra.mxu0 %v836
    %864 = vmatpush.msra.mxu0 %v835
    %865 = vmatmul.f32.gmra.mxu0 %v844
    %v866 = vpop.f32.mrf.mxu0
    %v867 = vadd.f32 %v841, %v866
    %868 = vmatmul.f32.gmra.mxu0 %v847
    %v869 = vpop.f32.mrf.mxu0
    %v870 = vadd.f32 %v841, %v869
    %871 = vdwg.mxu0
    %v872 = vmax.f32 %v867, 0.0
    %v873 = vmax.f32 %v870, 0.0
    %v874 = vld [vmem:[%s13] sm:$0xff]
    %v875 = vld [vmem:[%s13 + $0x8] sm:$0xff]
    %v876 = vld [vmem:[%s13 + $0x10] sm:$0xff]
    %v877 = vld [vmem:[%s13 + $0x18] sm:$0xff]
    %v878 = vld [vmem:[%s13 + $0x20] sm:$0xff]
    %v879 = vld [vmem:[%s13 + $0x28] sm:$0xff]
    %v880 = vld [vmem:[%s13 + $0x30] sm:$0xff]
    %v881 = vld [vmem:[%s13 + $0x38] sm:$0xff]
    %v882 = vld [vmem:[%s14] sm:$0x1]
    %v884 = vperm.slane %v882, 0
    %vm886 = vcmask 523264
    %v888 = vsel %vm886, %v872, 0
    %v891 = vsel %vm886, %v873, 0
    %893 = vmatpush.msra.mxu0 0.0
    %894 = vmatpush.msra.mxu0 0.0
    %895 = vmatpush.msra.mxu0 0.0
    %896 = vmatpush.msra.mxu0 0.0
    %897 = vmatpush.msra.mxu0 0.0
    %898 = vmatpush.msra.mxu0 0.0
    %899 = vmatpush.msra.mxu0 0.0
    %900 = vmatpush.msra.mxu0 0.0
    %901 = vmatpush.msra.mxu0 %v881
    %902 = vmatpush.msra.mxu0 %v880
    %903 = vmatpush.msra.mxu0 %v879
    %904 = vmatpush.msra.mxu0 %v878
    %905 = vmatpush.msra.mxu0 %v877
    %906 = vmatpush.msra.mxu0 %v876
    %907 = vmatpush.msra.mxu0 %v875
    %908 = vmatpush.msra.mxu0 %v874
    %909 = vmatmul.f32.gmra.mxu0 %v888
    %v910 = vpop.f32.mrf.mxu0
    %v911 = vadd.f32 %v884, %v910
    %912 = vmatmul.f32.gmra.mxu0 %v891
    %v913 = vpop.f32.mrf.mxu0
    %v914 = vadd.f32 %v884, %v913
    %915 = vdwg.mxu0
    %v916 = vadd.f32 %v777, %v911
    %v917 = vadd.f32 %v778, %v914
    %s918 = scalar_lea.vmem %s3, 1
    %v919 = vld [vmem:[%s918] sm:$0x1]
    %s920 = scalar_lea.vmem %s4, 1
    %v921 = vld [vmem:[%s920] sm:$0x1]
    %v922 = vsel %vm74, %v916, 0.0
    %923 = vadd.xlane.f32.xlu0 %v922
    %v924 = vpop.xlane.xlu0 %923
    %v925 = vsel %vm74, %v917, 0.0
    %926 = vadd.xlane.f32.xlu0 %v925
    %v927 = vpop.xlane.xlu0 %926
    %v928 = vmul.f32 %v924, %v87
    %v929 = vmul.f32 %v927, %v87
    %v930 = vsub.f32 %v916, %v928
    %v931 = vsub.f32 %v917, %v929
    %v932 = vmul.f32 %v930, %v930
    %v933 = vmul.f32 %v931, %v931
    %v934 = vsel %vm74, %v932, 0.0
    %935 = vadd.xlane.f32.xlu0 %v934
    %v936 = vpop.xlane.xlu0 %935
    %v937 = vsel %vm74, %v933, 0.0
    %938 = vadd.xlane.f32.xlu0 %v937
    %v939 = vpop.xlane.xlu0 %938
    %v940 = vmul.f32 %v936, %v87
    %v941 = vmul.f32 %v939, %v87
    %v942 = vadd.f32 %v940, 1e-05
    %v943 = vadd.f32 %v941, 1e-05
    %v944 = vrsqrt.pop %v942
    %v945 = vmul.f32 %v944, %v942
    %v946 = vmul.f32 %v945, %v944
    %v947 = vmul.f32 0.5, %v946
    %v948 = vsub.f32 1.5, %v947
    %v949 = vmul.f32 %v944, %v948
    %vm950 = vweird.f32 %v942
    %vm951 = vweird.f32 %v944
    %vm952 = vmor %vm950, %vm951
    %v953 = vsel %vm952, %v944, %v949
    %v954 = vrsqrt.pop %v943
    %v955 = vmul.f32 %v954, %v943
    %v956 = vmul.f32 %v955, %v954
    %v957 = vmul.f32 0.5, %v956
    %v958 = vsub.f32 1.5, %v957
    %v959 = vmul.f32 %v954, %v958
    %vm960 = vweird.f32 %v943
    %vm961 = vweird.f32 %v954
    %vm962 = vmor %vm960, %vm961
    %v963 = vsel %vm962, %v954, %v959
    %v964 = vmul.f32 %v930, %v953
    %v965 = vmul.f32 %v931, %v963
    %v967 = vperm.slane %v919, 0
    %v969 = vmul.f32 %v964, %v967
    %v970 = vmul.f32 %v965, %v967
    %v972 = vperm.slane %v921, 0
    %v974 = vadd.f32 %v969, %v972
    %v975 = vadd.f32 %v970, %v972
    %s976 = scalar_lea.vmem %s5, 32
    %v977 = vld [vmem:[%s976] sm:$0xff]
    %v978 = vld [vmem:[%s976 + $0x8] sm:$0xff]
    %v979 = vld [vmem:[%s976 + $0x10] sm:$0xff]
    %v980 = vld [vmem:[%s976 + $0x18] sm:$0xff]
    %s981 = scalar_lea.vmem %s6, 1
    %v982 = vld [vmem:[%s981] sm:$0x1]
    %v984 = vperm.slane %v982, 0
    %v987 = vsel %vm74, %v974, 0
    %v990 = vsel %vm74, %v975, 0
    %992 = vmatpush.msra.mxu0 0.0
    %993 = vmatpush.msra.mxu0 0.0
    %994 = vmatpush.msra.mxu0 0.0
    %995 = vmatpush.msra.mxu0 0.0
    %996 = vmatpush.msra.mxu0 0.0
    %997 = vmatpush.msra.mxu0 0.0
    %998 = vmatpush.msra.mxu0 0.0
    %999 = vmatpush.msra.mxu0 0.0
    %1000 = vmatpush.msra.mxu0 0.0
    %1001 = vmatpush.msra.mxu0 0.0
    %1002 = vmatpush.msra.mxu0 0.0
    %1003 = vmatpush.msra.mxu0 0.0
    %1004 = vmatpush.msra.mxu0 %v980
    %1005 = vmatpush.msra.mxu0 %v979
    %1006 = vmatpush.msra.mxu0 %v978
    %1007 = vmatpush.msra.mxu0 %v977
    %1008 = vmatmul.f32.gmra.mxu0 %v987
    %v1009 = vpop.f32.mrf.mxu0
    %v1010 = vadd.f32 %v984, %v1009
    %1011 = vmatmul.f32.gmra.mxu0 %v990
    %v1012 = vpop.f32.mrf.mxu0
    %v1013 = vadd.f32 %v984, %v1012
    %1014 = vdwg.mxu0
    %1016 = vrot.lane.b32.xlu0 %v1010, 96
    %v1017 = vpop.permute.xlu0 %1016
    %v1018 = vsel %vm176, %v1010, 0
    %v1020 = vsel %vm176, %v1017, 0
    %1022 = vmatpush.xpose.msra.mxu0 0.0
    %1023 = vmatpush.xpose.msra.mxu0 0.0
    %1024 = vmatpush.xpose.msra.mxu0 0.0
    %1025 = vmatpush.xpose.msra.mxu0 0.0
    %1026 = vmatpush.xpose.msra.mxu0 0.0
    %1027 = vmatpush.xpose.msra.mxu0 0.0
    %1028 = vmatpush.xpose.msra.mxu0 0.0
    %1029 = vmatpush.xpose.msra.mxu0 0.0
    %1030 = vmatpush.xpose.msra.mxu0 0.0
    %1031 = vmatpush.xpose.msra.mxu0 0.0
    %1032 = vmatpush.xpose.msra.mxu0 0.0
    %1033 = vmatpush.xpose.msra.mxu0 0.0
    %1034 = vmatpush.xpose.msra.mxu0 0.0
    %1035 = vmatpush.xpose.msra.mxu0 0.0
    %1036 = vmatpush.xpose.msra.mxu0 0.0
    %1037 = vmatpush.xpose.msra.mxu0 %v1020
    %1038 = vmatmul.f32.gmra.mxu0 %v1018
    %v1039 = vpop.f32.mrf.mxu0
    %v1040 = vadd.f32 0.0, %v1039
    %1041 = vdwg.mxu0
    %1043 = vrot.lane.b32.xlu0 %v1013, 96
    %v1044 = vpop.permute.xlu0 %1043
    %v1045 = vsel %vm176, %v1013, 0
    %v1047 = vsel %vm176, %v1044, 0
    %1049 = vmatpush.xpose.msra.mxu0 0.0
    %1050 = vmatpush.xpose.msra.mxu0 0.0
    %1051 = vmatpush.xpose.msra.mxu0 0.0
    %1052 = vmatpush.xpose.msra.mxu0 0.0
    %1053 = vmatpush.xpose.msra.mxu0 0.0
    %1054 = vmatpush.xpose.msra.mxu0 0.0
    %1055 = vmatpush.xpose.msra.mxu0 0.0
    %1056 = vmatpush.xpose.msra.mxu0 0.0
    %1057 = vmatpush.xpose.msra.mxu0 0.0
    %1058 = vmatpush.xpose.msra.mxu0 0.0
    %1059 = vmatpush.xpose.msra.mxu0 0.0
    %1060 = vmatpush.xpose.msra.mxu0 0.0
    %1061 = vmatpush.xpose.msra.mxu0 0.0
    %1062 = vmatpush.xpose.msra.mxu0 0.0
    %1063 = vmatpush.xpose.msra.mxu0 0.0
    %1064 = vmatpush.xpose.msra.mxu0 %v1047
    %1065 = vmatmul.f32.gmra.mxu0 %v1045
    %v1066 = vpop.f32.mrf.mxu0
    %v1067 = vadd.f32 0.0, %v1066
    %1068 = vdwg.mxu0
    %v1069 = vmul.f32 %v1040, 0.35355338
    %v1070 = vmul.f32 %v1067, 0.35355338
    %v1071 = vsel %vm70, %v1069, -1e+09
    %v1072 = vsel %vm71, %v1070, -1e+09
    %v1073 = vsel %vm176, %v1071, -inf
    %1074 = vmax.xlane.f32.xlu0 %v1073
    %v1075 = vpop.xlane.xlu0 %1074
    %v1076 = vsel %vm176, %v1072, -inf
    %1077 = vmax.xlane.f32.xlu0 %v1076
    %v1078 = vpop.xlane.xlu0 %1077
    %v1079 = vsub.f32 %v1071, %v1075
    %v1080 = vsub.f32 %v1072, %v1078
    %v1081 = vmul.f32 %v1079, 1.442695
    %v1082 = vpow.pop %v1081
    %v1083 = vmul.f32 %v1080, 1.442695
    %v1084 = vpow.pop %v1083
    %v1085 = vsel %vm176, %v1082, 0.0
    %1086 = vadd.xlane.f32.xlu0 %v1085
    %v1087 = vpop.xlane.xlu0 %1086
    %v1088 = vsel %vm176, %v1084, 0.0
    %1089 = vadd.xlane.f32.xlu0 %v1088
    %v1090 = vpop.xlane.xlu0 %1089
    %v1091 = vrcp.pop %v1087
    %v1092 = vrcp.pop %v1090
    %v1093 = vmul.f32 %v1082, %v1091
    %v1094 = vmul.f32 %v1084, %v1092
    %1095 = vrot.lane.b32.xlu0 %v1010, 64
    %v1096 = vpop.permute.xlu0 %1095
    %v1099 = vsel %vm176, %v1093, 0
    %1101 = vmatpush.msra.mxu0 0.0
    %1102 = vmatpush.msra.mxu0 0.0
    %1103 = vmatpush.msra.mxu0 0.0
    %1104 = vmatpush.msra.mxu0 0.0
    %1105 = vmatpush.msra.mxu0 0.0
    %1106 = vmatpush.msra.mxu0 0.0
    %1107 = vmatpush.msra.mxu0 0.0
    %1108 = vmatpush.msra.mxu0 0.0
    %1109 = vmatpush.msra.mxu0 0.0
    %1110 = vmatpush.msra.mxu0 0.0
    %1111 = vmatpush.msra.mxu0 0.0
    %1112 = vmatpush.msra.mxu0 0.0
    %1113 = vmatpush.msra.mxu0 0.0
    %1114 = vmatpush.msra.mxu0 0.0
    %1115 = vmatpush.msra.mxu0 0.0
    %1116 = vmatpush.msra.mxu0 %v1096
    %1117 = vmatmul.f32.gmra.mxu0 %v1099
    %v1118 = vpop.f32.mrf.mxu0
    %v1119 = vadd.f32 0.0, %v1118
    %1120 = vdwg.mxu0
    %1121 = vrot.lane.b32.xlu0 %v1013, 64
    %v1122 = vpop.permute.xlu0 %1121
    %v1125 = vsel %vm176, %v1094, 0
    %1127 = vmatpush.msra.mxu0 0.0
    %1128 = vmatpush.msra.mxu0 0.0
    %1129 = vmatpush.msra.mxu0 0.0
    %1130 = vmatpush.msra.mxu0 0.0
    %1131 = vmatpush.msra.mxu0 0.0
    %1132 = vmatpush.msra.mxu0 0.0
    %1133 = vmatpush.msra.mxu0 0.0
    %1134 = vmatpush.msra.mxu0 0.0
    %1135 = vmatpush.msra.mxu0 0.0
    %1136 = vmatpush.msra.mxu0 0.0
    %1137 = vmatpush.msra.mxu0 0.0
    %1138 = vmatpush.msra.mxu0 0.0
    %1139 = vmatpush.msra.mxu0 0.0
    %1140 = vmatpush.msra.mxu0 0.0
    %1141 = vmatpush.msra.mxu0 0.0
    %1142 = vmatpush.msra.mxu0 %v1122
    %1143 = vmatmul.f32.gmra.mxu0 %v1125
    %v1144 = vpop.f32.mrf.mxu0
    %v1145 = vadd.f32 0.0, %v1144
    %1146 = vdwg.mxu0
    %1147 = vrot.lane.b32.xlu0 %v1010, 120
    %v1148 = vpop.permute.xlu0 %1147
    %1149 = vrot.lane.b32.xlu0 %v1010, 88
    %v1150 = vpop.permute.xlu0 %1149
    %v1151 = vsel %vm176, %v1148, 0
    %v1153 = vsel %vm176, %v1150, 0
    %1155 = vmatpush.xpose.msra.mxu0 0.0
    %1156 = vmatpush.xpose.msra.mxu0 0.0
    %1157 = vmatpush.xpose.msra.mxu0 0.0
    %1158 = vmatpush.xpose.msra.mxu0 0.0
    %1159 = vmatpush.xpose.msra.mxu0 0.0
    %1160 = vmatpush.xpose.msra.mxu0 0.0
    %1161 = vmatpush.xpose.msra.mxu0 0.0
    %1162 = vmatpush.xpose.msra.mxu0 0.0
    %1163 = vmatpush.xpose.msra.mxu0 0.0
    %1164 = vmatpush.xpose.msra.mxu0 0.0
    %1165 = vmatpush.xpose.msra.mxu0 0.0
    %1166 = vmatpush.xpose.msra.mxu0 0.0
    %1167 = vmatpush.xpose.msra.mxu0 0.0
    %1168 = vmatpush.xpose.msra.mxu0 0.0
    %1169 = vmatpush.xpose.msra.mxu0 0.0
    %1170 = vmatpush.xpose.msra.mxu0 %v1153
    %1171 = vmatmul.f32.gmra.mxu0 %v1151
    %v1172 = vpop.f32.mrf.mxu0
    %v1173 = vadd.f32 0.0, %v1172
    %1174 = vdwg.mxu0
    %1175 = vrot.lane.b32.xlu0 %v1013, 120
    %v1176 = vpop.permute.xlu0 %1175
    %1177 = vrot.lane.b32.xlu0 %v1013, 88
    %v1178 = vpop.permute.xlu0 %1177
    %v1179 = vsel %vm176, %v1176, 0
    %v1181 = vsel %vm176, %v1178, 0
    %1183 = vmatpush.xpose.msra.mxu0 0.0
    %1184 = vmatpush.xpose.msra.mxu0 0.0
    %1185 = vmatpush.xpose.msra.mxu0 0.0
    %1186 = vmatpush.xpose.msra.mxu0 0.0
    %1187 = vmatpush.xpose.msra.mxu0 0.0
    %1188 = vmatpush.xpose.msra.mxu0 0.0
    %1189 = vmatpush.xpose.msra.mxu0 0.0
    %1190 = vmatpush.xpose.msra.mxu0 0.0
    %1191 = vmatpush.xpose.msra.mxu0 0.0
    %1192 = vmatpush.xpose.msra.mxu0 0.0
    %1193 = vmatpush.xpose.msra.mxu0 0.0
    %1194 = vmatpush.xpose.msra.mxu0 0.0
    %1195 = vmatpush.xpose.msra.mxu0 0.0
    %1196 = vmatpush.xpose.msra.mxu0 0.0
    %1197 = vmatpush.xpose.msra.mxu0 0.0
    %1198 = vmatpush.xpose.msra.mxu0 %v1181
    %1199 = vmatmul.f32.gmra.mxu0 %v1179
    %v1200 = vpop.f32.mrf.mxu0
    %v1201 = vadd.f32 0.0, %v1200
    %1202 = vdwg.mxu0
    %v1203 = vmul.f32 %v1173, 0.35355338
    %v1204 = vmul.f32 %v1201, 0.35355338
    %v1205 = vsel %vm70, %v1203, -1e+09
    %v1206 = vsel %vm71, %v1204, -1e+09
    %v1207 = vsel %vm176, %v1205, -inf
    %1208 = vmax.xlane.f32.xlu0 %v1207
    %v1209 = vpop.xlane.xlu0 %1208
    %v1210 = vsel %vm176, %v1206, -inf
    %1211 = vmax.xlane.f32.xlu0 %v1210
    %v1212 = vpop.xlane.xlu0 %1211
    %v1213 = vsub.f32 %v1205, %v1209
    %v1214 = vsub.f32 %v1206, %v1212
    %v1215 = vmul.f32 %v1213, 1.442695
    %v1216 = vpow.pop %v1215
    %v1217 = vmul.f32 %v1214, 1.442695
    %v1218 = vpow.pop %v1217
    %v1219 = vsel %vm176, %v1216, 0.0
    %1220 = vadd.xlane.f32.xlu0 %v1219
    %v1221 = vpop.xlane.xlu0 %1220
    %v1222 = vsel %vm176, %v1218, 0.0
    %1223 = vadd.xlane.f32.xlu0 %v1222
    %v1224 = vpop.xlane.xlu0 %1223
    %v1225 = vrcp.pop %v1221
    %v1226 = vrcp.pop %v1224
    %v1227 = vmul.f32 %v1216, %v1225
    %v1228 = vmul.f32 %v1218, %v1226
    %1229 = vrot.lane.b32.xlu0 %v1010, 56
    %v1230 = vpop.permute.xlu0 %1229
    %v1233 = vsel %vm176, %v1227, 0
    %1235 = vmatpush.msra.mxu0 0.0
    %1236 = vmatpush.msra.mxu0 0.0
    %1237 = vmatpush.msra.mxu0 0.0
    %1238 = vmatpush.msra.mxu0 0.0
    %1239 = vmatpush.msra.mxu0 0.0
    %1240 = vmatpush.msra.mxu0 0.0
    %1241 = vmatpush.msra.mxu0 0.0
    %1242 = vmatpush.msra.mxu0 0.0
    %1243 = vmatpush.msra.mxu0 0.0
    %1244 = vmatpush.msra.mxu0 0.0
    %1245 = vmatpush.msra.mxu0 0.0
    %1246 = vmatpush.msra.mxu0 0.0
    %1247 = vmatpush.msra.mxu0 0.0
    %1248 = vmatpush.msra.mxu0 0.0
    %1249 = vmatpush.msra.mxu0 0.0
    %1250 = vmatpush.msra.mxu0 %v1230
    %1251 = vmatmul.f32.gmra.mxu0 %v1233
    %v1252 = vpop.f32.mrf.mxu0
    %v1253 = vadd.f32 0.0, %v1252
    %1254 = vdwg.mxu0
    %1255 = vrot.lane.b32.xlu0 %v1013, 56
    %v1256 = vpop.permute.xlu0 %1255
    %v1259 = vsel %vm176, %v1228, 0
    %1261 = vmatpush.msra.mxu0 0.0
    %1262 = vmatpush.msra.mxu0 0.0
    %1263 = vmatpush.msra.mxu0 0.0
    %1264 = vmatpush.msra.mxu0 0.0
    %1265 = vmatpush.msra.mxu0 0.0
    %1266 = vmatpush.msra.mxu0 0.0
    %1267 = vmatpush.msra.mxu0 0.0
    %1268 = vmatpush.msra.mxu0 0.0
    %1269 = vmatpush.msra.mxu0 0.0
    %1270 = vmatpush.msra.mxu0 0.0
    %1271 = vmatpush.msra.mxu0 0.0
    %1272 = vmatpush.msra.mxu0 0.0
    %1273 = vmatpush.msra.mxu0 0.0
    %1274 = vmatpush.msra.mxu0 0.0
    %1275 = vmatpush.msra.mxu0 0.0
    %1276 = vmatpush.msra.mxu0 %v1256
    %1277 = vmatmul.f32.gmra.mxu0 %v1259
    %v1278 = vpop.f32.mrf.mxu0
    %v1279 = vadd.f32 0.0, %v1278
    %1280 = vdwg.mxu0
    %1281 = vrot.lane.b32.xlu0 %v1010, 112
    %v1282 = vpop.permute.xlu0 %1281
    %1283 = vrot.lane.b32.xlu0 %v1010, 80
    %v1284 = vpop.permute.xlu0 %1283
    %v1285 = vsel %vm176, %v1282, 0
    %v1287 = vsel %vm176, %v1284, 0
    %1289 = vmatpush.xpose.msra.mxu0 0.0
    %1290 = vmatpush.xpose.msra.mxu0 0.0
    %1291 = vmatpush.xpose.msra.mxu0 0.0
    %1292 = vmatpush.xpose.msra.mxu0 0.0
    %1293 = vmatpush.xpose.msra.mxu0 0.0
    %1294 = vmatpush.xpose.msra.mxu0 0.0
    %1295 = vmatpush.xpose.msra.mxu0 0.0
    %1296 = vmatpush.xpose.msra.mxu0 0.0
    %1297 = vmatpush.xpose.msra.mxu0 0.0
    %1298 = vmatpush.xpose.msra.mxu0 0.0
    %1299 = vmatpush.xpose.msra.mxu0 0.0
    %1300 = vmatpush.xpose.msra.mxu0 0.0
    %1301 = vmatpush.xpose.msra.mxu0 0.0
    %1302 = vmatpush.xpose.msra.mxu0 0.0
    %1303 = vmatpush.xpose.msra.mxu0 0.0
    %1304 = vmatpush.xpose.msra.mxu0 %v1287
    %1305 = vmatmul.f32.gmra.mxu0 %v1285
    %v1306 = vpop.f32.mrf.mxu0
    %v1307 = vadd.f32 0.0, %v1306
    %1308 = vdwg.mxu0
    %1309 = vrot.lane.b32.xlu0 %v1013, 112
    %v1310 = vpop.permute.xlu0 %1309
    %1311 = vrot.lane.b32.xlu0 %v1013, 80
    %v1312 = vpop.permute.xlu0 %1311
    %v1313 = vsel %vm176, %v1310, 0
    %v1315 = vsel %vm176, %v1312, 0
    %1317 = vmatpush.xpose.msra.mxu0 0.0
    %1318 = vmatpush.xpose.msra.mxu0 0.0
    %1319 = vmatpush.xpose.msra.mxu0 0.0
    %1320 = vmatpush.xpose.msra.mxu0 0.0
    %1321 = vmatpush.xpose.msra.mxu0 0.0
    %1322 = vmatpush.xpose.msra.mxu0 0.0
    %1323 = vmatpush.xpose.msra.mxu0 0.0
    %1324 = vmatpush.xpose.msra.mxu0 0.0
    %1325 = vmatpush.xpose.msra.mxu0 0.0
    %1326 = vmatpush.xpose.msra.mxu0 0.0
    %1327 = vmatpush.xpose.msra.mxu0 0.0
    %1328 = vmatpush.xpose.msra.mxu0 0.0
    %1329 = vmatpush.xpose.msra.mxu0 0.0
    %1330 = vmatpush.xpose.msra.mxu0 0.0
    %1331 = vmatpush.xpose.msra.mxu0 0.0
    %1332 = vmatpush.xpose.msra.mxu0 %v1315
    %1333 = vmatmul.f32.gmra.mxu0 %v1313
    %v1334 = vpop.f32.mrf.mxu0
    %v1335 = vadd.f32 0.0, %v1334
    %1336 = vdwg.mxu0
    %v1337 = vmul.f32 %v1307, 0.35355338
    %v1338 = vmul.f32 %v1335, 0.35355338
    %v1339 = vsel %vm70, %v1337, -1e+09
    %v1340 = vsel %vm71, %v1338, -1e+09
    %v1341 = vsel %vm176, %v1339, -inf
    %1342 = vmax.xlane.f32.xlu0 %v1341
    %v1343 = vpop.xlane.xlu0 %1342
    %v1344 = vsel %vm176, %v1340, -inf
    %1345 = vmax.xlane.f32.xlu0 %v1344
    %v1346 = vpop.xlane.xlu0 %1345
    %v1347 = vsub.f32 %v1339, %v1343
    %v1348 = vsub.f32 %v1340, %v1346
    %v1349 = vmul.f32 %v1347, 1.442695
    %v1350 = vpow.pop %v1349
    %v1351 = vmul.f32 %v1348, 1.442695
    %v1352 = vpow.pop %v1351
    %v1353 = vsel %vm176, %v1350, 0.0
    %1354 = vadd.xlane.f32.xlu0 %v1353
    %v1355 = vpop.xlane.xlu0 %1354
    %v1356 = vsel %vm176, %v1352, 0.0
    %1357 = vadd.xlane.f32.xlu0 %v1356
    %v1358 = vpop.xlane.xlu0 %1357
    %v1359 = vrcp.pop %v1355
    %v1360 = vrcp.pop %v1358
    %v1361 = vmul.f32 %v1350, %v1359
    %v1362 = vmul.f32 %v1352, %v1360
    %1363 = vrot.lane.b32.xlu0 %v1010, 48
    %v1364 = vpop.permute.xlu0 %1363
    %v1367 = vsel %vm176, %v1361, 0
    %1369 = vmatpush.msra.mxu0 0.0
    %1370 = vmatpush.msra.mxu0 0.0
    %1371 = vmatpush.msra.mxu0 0.0
    %1372 = vmatpush.msra.mxu0 0.0
    %1373 = vmatpush.msra.mxu0 0.0
    %1374 = vmatpush.msra.mxu0 0.0
    %1375 = vmatpush.msra.mxu0 0.0
    %1376 = vmatpush.msra.mxu0 0.0
    %1377 = vmatpush.msra.mxu0 0.0
    %1378 = vmatpush.msra.mxu0 0.0
    %1379 = vmatpush.msra.mxu0 0.0
    %1380 = vmatpush.msra.mxu0 0.0
    %1381 = vmatpush.msra.mxu0 0.0
    %1382 = vmatpush.msra.mxu0 0.0
    %1383 = vmatpush.msra.mxu0 0.0
    %1384 = vmatpush.msra.mxu0 %v1364
    %1385 = vmatmul.f32.gmra.mxu0 %v1367
    %v1386 = vpop.f32.mrf.mxu0
    %v1387 = vadd.f32 0.0, %v1386
    %1388 = vdwg.mxu0
    %1389 = vrot.lane.b32.xlu0 %v1013, 48
    %v1390 = vpop.permute.xlu0 %1389
    %v1393 = vsel %vm176, %v1362, 0
    %1395 = vmatpush.msra.mxu0 0.0
    %1396 = vmatpush.msra.mxu0 0.0
    %1397 = vmatpush.msra.mxu0 0.0
    %1398 = vmatpush.msra.mxu0 0.0
    %1399 = vmatpush.msra.mxu0 0.0
    %1400 = vmatpush.msra.mxu0 0.0
    %1401 = vmatpush.msra.mxu0 0.0
    %1402 = vmatpush.msra.mxu0 0.0
    %1403 = vmatpush.msra.mxu0 0.0
    %1404 = vmatpush.msra.mxu0 0.0
    %1405 = vmatpush.msra.mxu0 0.0
    %1406 = vmatpush.msra.mxu0 0.0
    %1407 = vmatpush.msra.mxu0 0.0
    %1408 = vmatpush.msra.mxu0 0.0
    %1409 = vmatpush.msra.mxu0 0.0
    %1410 = vmatpush.msra.mxu0 %v1390
    %1411 = vmatmul.f32.gmra.mxu0 %v1393
    %v1412 = vpop.f32.mrf.mxu0
    %v1413 = vadd.f32 0.0, %v1412
    %1414 = vdwg.mxu0
    %1415 = vrot.lane.b32.xlu0 %v1010, 104
    %v1416 = vpop.permute.xlu0 %1415
    %1417 = vrot.lane.b32.xlu0 %v1010, 72
    %v1418 = vpop.permute.xlu0 %1417
    %v1419 = vsel %vm176, %v1416, 0
    %v1421 = vsel %vm176, %v1418, 0
    %1423 = vmatpush.xpose.msra.mxu0 0.0
    %1424 = vmatpush.xpose.msra.mxu0 0.0
    %1425 = vmatpush.xpose.msra.mxu0 0.0
    %1426 = vmatpush.xpose.msra.mxu0 0.0
    %1427 = vmatpush.xpose.msra.mxu0 0.0
    %1428 = vmatpush.xpose.msra.mxu0 0.0
    %1429 = vmatpush.xpose.msra.mxu0 0.0
    %1430 = vmatpush.xpose.msra.mxu0 0.0
    %1431 = vmatpush.xpose.msra.mxu0 0.0
    %1432 = vmatpush.xpose.msra.mxu0 0.0
    %1433 = vmatpush.xpose.msra.mxu0 0.0
    %1434 = vmatpush.xpose.msra.mxu0 0.0
    %1435 = vmatpush.xpose.msra.mxu0 0.0
    %1436 = vmatpush.xpose.msra.mxu0 0.0
    %1437 = vmatpush.xpose.msra.mxu0 0.0
    %1438 = vmatpush.xpose.msra.mxu0 %v1421
    %1439 = vmatmul.f32.gmra.mxu0 %v1419
    %v1440 = vpop.f32.mrf.mxu0
    %v1441 = vadd.f32 0.0, %v1440
    %1442 = vdwg.mxu0
    %1443 = vrot.lane.b32.xlu0 %v1013, 104
    %v1444 = vpop.permute.xlu0 %1443
    %1445 = vrot.lane.b32.xlu0 %v1013, 72
    %v1446 = vpop.permute.xlu0 %1445
    %v1447 = vsel %vm176, %v1444, 0
    %v1449 = vsel %vm176, %v1446, 0
    %1451 = vmatpush.xpose.msra.mxu0 0.0
    %1452 = vmatpush.xpose.msra.mxu0 0.0
    %1453 = vmatpush.xpose.msra.mxu0 0.0
    %1454 = vmatpush.xpose.msra.mxu0 0.0
    %1455 = vmatpush.xpose.msra.mxu0 0.0
    %1456 = vmatpush.xpose.msra.mxu0 0.0
    %1457 = vmatpush.xpose.msra.mxu0 0.0
    %1458 = vmatpush.xpose.msra.mxu0 0.0
    %1459 = vmatpush.xpose.msra.mxu0 0.0
    %1460 = vmatpush.xpose.msra.mxu0 0.0
    %1461 = vmatpush.xpose.msra.mxu0 0.0
    %1462 = vmatpush.xpose.msra.mxu0 0.0
    %1463 = vmatpush.xpose.msra.mxu0 0.0
    %1464 = vmatpush.xpose.msra.mxu0 0.0
    %1465 = vmatpush.xpose.msra.mxu0 0.0
    %1466 = vmatpush.xpose.msra.mxu0 %v1449
    %1467 = vmatmul.f32.gmra.mxu0 %v1447
    %v1468 = vpop.f32.mrf.mxu0
    %v1469 = vadd.f32 0.0, %v1468
    %1470 = vdwg.mxu0
    %v1471 = vmul.f32 %v1441, 0.35355338
    %v1472 = vmul.f32 %v1469, 0.35355338
    %v1473 = vsel %vm70, %v1471, -1e+09
    %v1474 = vsel %vm71, %v1472, -1e+09
    %v1475 = vsel %vm176, %v1473, -inf
    %1476 = vmax.xlane.f32.xlu0 %v1475
    %v1477 = vpop.xlane.xlu0 %1476
    %v1478 = vsel %vm176, %v1474, -inf
    %1479 = vmax.xlane.f32.xlu0 %v1478
    %v1480 = vpop.xlane.xlu0 %1479
    %v1481 = vsub.f32 %v1473, %v1477
    %v1482 = vsub.f32 %v1474, %v1480
    %v1483 = vmul.f32 %v1481, 1.442695
    %v1484 = vpow.pop %v1483
    %v1485 = vmul.f32 %v1482, 1.442695
    %v1486 = vpow.pop %v1485
    %v1487 = vsel %vm176, %v1484, 0.0
    %1488 = vadd.xlane.f32.xlu0 %v1487
    %v1489 = vpop.xlane.xlu0 %1488
    %v1490 = vsel %vm176, %v1486, 0.0
    %1491 = vadd.xlane.f32.xlu0 %v1490
    %v1492 = vpop.xlane.xlu0 %1491
    %v1493 = vrcp.pop %v1489
    %v1494 = vrcp.pop %v1492
    %v1495 = vmul.f32 %v1484, %v1493
    %v1496 = vmul.f32 %v1486, %v1494
    %1497 = vrot.lane.b32.xlu0 %v1010, 40
    %v1498 = vpop.permute.xlu0 %1497
    %v1501 = vsel %vm176, %v1495, 0
    %1503 = vmatpush.msra.mxu0 0.0
    %1504 = vmatpush.msra.mxu0 0.0
    %1505 = vmatpush.msra.mxu0 0.0
    %1506 = vmatpush.msra.mxu0 0.0
    %1507 = vmatpush.msra.mxu0 0.0
    %1508 = vmatpush.msra.mxu0 0.0
    %1509 = vmatpush.msra.mxu0 0.0
    %1510 = vmatpush.msra.mxu0 0.0
    %1511 = vmatpush.msra.mxu0 0.0
    %1512 = vmatpush.msra.mxu0 0.0
    %1513 = vmatpush.msra.mxu0 0.0
    %1514 = vmatpush.msra.mxu0 0.0
    %1515 = vmatpush.msra.mxu0 0.0
    %1516 = vmatpush.msra.mxu0 0.0
    %1517 = vmatpush.msra.mxu0 0.0
    %1518 = vmatpush.msra.mxu0 %v1498
    %1519 = vmatmul.f32.gmra.mxu0 %v1501
    %v1520 = vpop.f32.mrf.mxu0
    %v1521 = vadd.f32 0.0, %v1520
    %1522 = vdwg.mxu0
    %1523 = vrot.lane.b32.xlu0 %v1013, 40
    %v1524 = vpop.permute.xlu0 %1523
    %v1527 = vsel %vm176, %v1496, 0
    %1529 = vmatpush.msra.mxu0 0.0
    %1530 = vmatpush.msra.mxu0 0.0
    %1531 = vmatpush.msra.mxu0 0.0
    %1532 = vmatpush.msra.mxu0 0.0
    %1533 = vmatpush.msra.mxu0 0.0
    %1534 = vmatpush.msra.mxu0 0.0
    %1535 = vmatpush.msra.mxu0 0.0
    %1536 = vmatpush.msra.mxu0 0.0
    %1537 = vmatpush.msra.mxu0 0.0
    %1538 = vmatpush.msra.mxu0 0.0
    %1539 = vmatpush.msra.mxu0 0.0
    %1540 = vmatpush.msra.mxu0 0.0
    %1541 = vmatpush.msra.mxu0 0.0
    %1542 = vmatpush.msra.mxu0 0.0
    %1543 = vmatpush.msra.mxu0 0.0
    %1544 = vmatpush.msra.mxu0 %v1524
    %1545 = vmatmul.f32.gmra.mxu0 %v1527
    %v1546 = vpop.f32.mrf.mxu0
    %v1547 = vadd.f32 0.0, %v1546
    %1548 = vdwg.mxu0
    %1551 = vrot.lane.b32.xlu0 %v1253, 8
    %v1552 = vpop.permute.xlu0 %1551
    %1553 = vrot.lane.b32.xlu0 %v1279, 8
    %v1554 = vpop.permute.xlu0 %1553
    %1559 = vrot.lane.b32.xlu0 %v1387, 16
    %v1560 = vpop.permute.xlu0 %1559
    %1561 = vrot.lane.b32.xlu0 %v1413, 16
    %v1562 = vpop.permute.xlu0 %1561
    %1567 = vrot.lane.b32.xlu0 %v1521, 24
    %v1568 = vpop.permute.xlu0 %1567
    %1569 = vrot.lane.b32.xlu0 %v1547, 24
    %v1570 = vpop.permute.xlu0 %1569
    %v1573 = vsel %vm176, %v1119, %v1552
    %v1574 = vsel %vm176, %v1145, %v1554
    %v1575 = vsel %vm734, %v1573, %v1560
    %v1576 = vsel %vm734, %v1574, %v1562
    %v1577 = vsel %vm737, %v1575, %v1568
    %v1578 = vsel %vm737, %v1576, %v1570
    %s1579 = scalar_lea.vmem %s7, 32
    %v1580 = vld [vmem:[%s1579] sm:$0xff]
    %v1581 = vld [vmem:[%s1579 + $0x8] sm:$0xff]
    %v1582 = vld [vmem:[%s1579 + $0x10] sm:$0xff]
    %v1583 = vld [vmem:[%s1579 + $0x18] sm:$0xff]
    %s1584 = scalar_lea.vmem %s8, 1
    %v1585 = vld [vmem:[%s1584] sm:$0x1]
    %v1587 = vperm.slane %v1585, 0
    %v1590 = vsel %vm74, %v1577, 0
    %v1593 = vsel %vm74, %v1578, 0
    %1595 = vmatpush.msra.mxu0 0.0
    %1596 = vmatpush.msra.mxu0 0.0
    %1597 = vmatpush.msra.mxu0 0.0
    %1598 = vmatpush.msra.mxu0 0.0
    %1599 = vmatpush.msra.mxu0 0.0
    %1600 = vmatpush.msra.mxu0 0.0
    %1601 = vmatpush.msra.mxu0 0.0
    %1602 = vmatpush.msra.mxu0 0.0
    %1603 = vmatpush.msra.mxu0 0.0
    %1604 = vmatpush.msra.mxu0 0.0
    %1605 = vmatpush.msra.mxu0 0.0
    %1606 = vmatpush.msra.mxu0 0.0
    %1607 = vmatpush.msra.mxu0 %v1583
    %1608 = vmatpush.msra.mxu0 %v1582
    %1609 = vmatpush.msra.mxu0 %v1581
    %1610 = vmatpush.msra.mxu0 %v1580
    %1611 = vmatmul.f32.gmra.mxu0 %v1590
    %v1612 = vpop.f32.mrf.mxu0
    %v1613 = vadd.f32 %v1587, %v1612
    %1614 = vmatmul.f32.gmra.mxu0 %v1593
    %v1615 = vpop.f32.mrf.mxu0
    %v1616 = vadd.f32 %v1587, %v1615
    %1617 = vdwg.mxu0
    %v1618 = vadd.f32 %v916, %v1613
    %v1619 = vadd.f32 %v917, %v1616
    %s1620 = scalar_lea.vmem %s9, 1
    %v1621 = vld [vmem:[%s1620] sm:$0x1]
    %s1622 = scalar_lea.vmem %s10, 1
    %v1623 = vld [vmem:[%s1622] sm:$0x1]
    %v1624 = vsel %vm74, %v1618, 0.0
    %1625 = vadd.xlane.f32.xlu0 %v1624
    %v1626 = vpop.xlane.xlu0 %1625
    %v1627 = vsel %vm74, %v1619, 0.0
    %1628 = vadd.xlane.f32.xlu0 %v1627
    %v1629 = vpop.xlane.xlu0 %1628
    %v1630 = vmul.f32 %v1626, %v87
    %v1631 = vmul.f32 %v1629, %v87
    %v1632 = vsub.f32 %v1618, %v1630
    %v1633 = vsub.f32 %v1619, %v1631
    %v1634 = vmul.f32 %v1632, %v1632
    %v1635 = vmul.f32 %v1633, %v1633
    %v1636 = vsel %vm74, %v1634, 0.0
    %1637 = vadd.xlane.f32.xlu0 %v1636
    %v1638 = vpop.xlane.xlu0 %1637
    %v1639 = vsel %vm74, %v1635, 0.0
    %1640 = vadd.xlane.f32.xlu0 %v1639
    %v1641 = vpop.xlane.xlu0 %1640
    %v1642 = vmul.f32 %v1638, %v87
    %v1643 = vmul.f32 %v1641, %v87
    %v1644 = vadd.f32 %v1642, 1e-05
    %v1645 = vadd.f32 %v1643, 1e-05
    %v1646 = vrsqrt.pop %v1644
    %v1647 = vmul.f32 %v1646, %v1644
    %v1648 = vmul.f32 %v1647, %v1646
    %v1649 = vmul.f32 0.5, %v1648
    %v1650 = vsub.f32 1.5, %v1649
    %v1651 = vmul.f32 %v1646, %v1650
    %vm1652 = vweird.f32 %v1644
    %vm1653 = vweird.f32 %v1646
    %vm1654 = vmor %vm1652, %vm1653
    %v1655 = vsel %vm1654, %v1646, %v1651
    %v1656 = vrsqrt.pop %v1645
    %v1657 = vmul.f32 %v1656, %v1645
    %v1658 = vmul.f32 %v1657, %v1656
    %v1659 = vmul.f32 0.5, %v1658
    %v1660 = vsub.f32 1.5, %v1659
    %v1661 = vmul.f32 %v1656, %v1660
    %vm1662 = vweird.f32 %v1645
    %vm1663 = vweird.f32 %v1656
    %vm1664 = vmor %vm1662, %vm1663
    %v1665 = vsel %vm1664, %v1656, %v1661
    %v1666 = vmul.f32 %v1632, %v1655
    %v1667 = vmul.f32 %v1633, %v1665
    %v1669 = vperm.slane %v1621, 0
    %v1671 = vmul.f32 %v1666, %v1669
    %v1672 = vmul.f32 %v1667, %v1669
    %v1674 = vperm.slane %v1623, 0
    %v1676 = vadd.f32 %v1671, %v1674
    %v1677 = vadd.f32 %v1672, %v1674
    %s1678 = scalar_lea.vmem %s11, 32
    %v1679 = vld [vmem:[%s1678] sm:$0xff]
    %v1680 = vld [vmem:[%s1678 + $0x8] sm:$0xff]
    %v1681 = vld [vmem:[%s1678 + $0x10] sm:$0xff]
    %v1682 = vld [vmem:[%s1678 + $0x18] sm:$0xff]
    %s1683 = scalar_lea.vmem %s12, 1
    %v1684 = vld [vmem:[%s1683] sm:$0x1]
    %v1686 = vperm.slane %v1684, 0
    %v1689 = vsel %vm74, %v1676, 0
    %v1692 = vsel %vm74, %v1677, 0
    %1694 = vmatpush.msra.mxu0 0.0
    %1695 = vmatpush.msra.mxu0 0.0
    %1696 = vmatpush.msra.mxu0 0.0
    %1697 = vmatpush.msra.mxu0 0.0
    %1698 = vmatpush.msra.mxu0 0.0
    %1699 = vmatpush.msra.mxu0 0.0
    %1700 = vmatpush.msra.mxu0 0.0
    %1701 = vmatpush.msra.mxu0 0.0
    %1702 = vmatpush.msra.mxu0 0.0
    %1703 = vmatpush.msra.mxu0 0.0
    %1704 = vmatpush.msra.mxu0 0.0
    %1705 = vmatpush.msra.mxu0 0.0
    %1706 = vmatpush.msra.mxu0 %v1682
    %1707 = vmatpush.msra.mxu0 %v1681
    %1708 = vmatpush.msra.mxu0 %v1680
    %1709 = vmatpush.msra.mxu0 %v1679
    %1710 = vmatmul.f32.gmra.mxu0 %v1689
    %v1711 = vpop.f32.mrf.mxu0
    %v1712 = vadd.f32 %v1686, %v1711
    %1713 = vmatmul.f32.gmra.mxu0 %v1692
    %v1714 = vpop.f32.mrf.mxu0
    %v1715 = vadd.f32 %v1686, %v1714
    %1716 = vdwg.mxu0
    %v1717 = vmax.f32 %v1712, 0.0
    %v1718 = vmax.f32 %v1715, 0.0
    %s1719 = scalar_lea.vmem %s13, 64
    %v1720 = vld [vmem:[%s1719] sm:$0xff]
    %v1721 = vld [vmem:[%s1719 + $0x8] sm:$0xff]
    %v1722 = vld [vmem:[%s1719 + $0x10] sm:$0xff]
    %v1723 = vld [vmem:[%s1719 + $0x18] sm:$0xff]
    %v1724 = vld [vmem:[%s1719 + $0x20] sm:$0xff]
    %v1725 = vld [vmem:[%s1719 + $0x28] sm:$0xff]
    %v1726 = vld [vmem:[%s1719 + $0x30] sm:$0xff]
    %v1727 = vld [vmem:[%s1719 + $0x38] sm:$0xff]
    %s1728 = scalar_lea.vmem %s14, 1
    %v1729 = vld [vmem:[%s1728] sm:$0x1]
    %v1731 = vperm.slane %v1729, 0
    %v1734 = vsel %vm886, %v1717, 0
    %v1737 = vsel %vm886, %v1718, 0
    %1739 = vmatpush.msra.mxu0 0.0
    %1740 = vmatpush.msra.mxu0 0.0
    %1741 = vmatpush.msra.mxu0 0.0
    %1742 = vmatpush.msra.mxu0 0.0
    %1743 = vmatpush.msra.mxu0 0.0
    %1744 = vmatpush.msra.mxu0 0.0
    %1745 = vmatpush.msra.mxu0 0.0
    %1746 = vmatpush.msra.mxu0 0.0
    %1747 = vmatpush.msra.mxu0 %v1727
    %1748 = vmatpush.msra.mxu0 %v1726
    %1749 = vmatpush.msra.mxu0 %v1725
    %1750 = vmatpush.msra.mxu0 %v1724
    %1751 = vmatpush.msra.mxu0 %v1723
    %1752 = vmatpush.msra.mxu0 %v1722
    %1753 = vmatpush.msra.mxu0 %v1721
    %1754 = vmatpush.msra.mxu0 %v1720
    %1755 = vmatmul.f32.gmra.mxu0 %v1734
    %v1756 = vpop.f32.mrf.mxu0
    %v1757 = vadd.f32 %v1731, %v1756
    %1758 = vmatmul.f32.gmra.mxu0 %v1737
    %v1759 = vpop.f32.mrf.mxu0
    %v1760 = vadd.f32 %v1731, %v1759
    %1761 = vdwg.mxu0
    %v1762 = vadd.f32 %v1618, %v1757
    %v1763 = vadd.f32 %v1619, %v1760
    %v1764 = vld [vmem:[%s15] sm:$0x1]
    %v1765 = vld [vmem:[%s16] sm:$0x1]
    %v1766 = vsel %vm74, %v1762, 0.0
    %1767 = vadd.xlane.f32.xlu0 %v1766
    %v1768 = vpop.xlane.xlu0 %1767
    %v1769 = vsel %vm74, %v1763, 0.0
    %1770 = vadd.xlane.f32.xlu0 %v1769
    %v1771 = vpop.xlane.xlu0 %1770
    %v1772 = vmul.f32 %v1768, %v87
    %v1773 = vmul.f32 %v1771, %v87
    %v1774 = vsub.f32 %v1762, %v1772
    %v1775 = vsub.f32 %v1763, %v1773
    %v1776 = vmul.f32 %v1774, %v1774
    %v1777 = vmul.f32 %v1775, %v1775
    %v1778 = vsel %vm74, %v1776, 0.0
    %1779 = vadd.xlane.f32.xlu0 %v1778
    %v1780 = vpop.xlane.xlu0 %1779
    %v1781 = vsel %vm74, %v1777, 0.0
    %1782 = vadd.xlane.f32.xlu0 %v1781
    %v1783 = vpop.xlane.xlu0 %1782
    %v1784 = vmul.f32 %v1780, %v87
    %v1785 = vmul.f32 %v1783, %v87
    %v1786 = vadd.f32 %v1784, 1e-05
    %v1787 = vadd.f32 %v1785, 1e-05
    %v1788 = vrsqrt.pop %v1786
    %v1789 = vmul.f32 %v1788, %v1786
    %v1790 = vmul.f32 %v1789, %v1788
    %v1791 = vmul.f32 0.5, %v1790
    %v1792 = vsub.f32 1.5, %v1791
    %v1793 = vmul.f32 %v1788, %v1792
    %vm1794 = vweird.f32 %v1786
    %vm1795 = vweird.f32 %v1788
    %vm1796 = vmor %vm1794, %vm1795
    %v1797 = vsel %vm1796, %v1788, %v1793
    %v1798 = vrsqrt.pop %v1787
    %v1799 = vmul.f32 %v1798, %v1787
    %v1800 = vmul.f32 %v1799, %v1798
    %v1801 = vmul.f32 0.5, %v1800
    %v1802 = vsub.f32 1.5, %v1801
    %v1803 = vmul.f32 %v1798, %v1802
    %vm1804 = vweird.f32 %v1787
    %vm1805 = vweird.f32 %v1798
    %vm1806 = vmor %vm1804, %vm1805
    %v1807 = vsel %vm1806, %v1798, %v1803
    %v1808 = vmul.f32 %v1774, %v1797
    %v1809 = vmul.f32 %v1775, %v1807
    %v1811 = vperm.slane %v1764, 0
    %v1813 = vmul.f32 %v1808, %v1811
    %v1814 = vmul.f32 %v1809, %v1811
    %v1816 = vperm.slane %v1765, 0
    %v1818 = vadd.f32 %v1813, %v1816
    %v1819 = vadd.f32 %v1814, %v1816
    %1820 = vst.msk [vmem:[#allocation2] sm:$0xff] %vm74, %v1818
    %1821 = vst.msk [vmem:[#allocation2 + $0x8] sm:$0xff] %vm74, %v1819
    // Predicated region
    $region70: #{transformer_encoder_forward.1} parent=1 // pred_check
      _
    $region71: #{transformer_encoder_forward.1} parent=1 // pred_check_branch
      %1823 = sbr.rel (0) target = $region73
    $region72: #{transformer_encoder_forward.1} parent=1 // pred_region
      %1825 = vsyncadd [#allocation3], 0
      %s1826 = sshll.u32 [#allocation2], 4
      %s1827 = int_to_ptr.vmem [resolvable:$true] %s1826
      %s1828 = sshll.u32 %s17, 4
      %s1829 = int_to_ptr.hbm [resolvable:$true] %s1828
      %1834 = dma.vmem_to_hbm [thread:$0]  %s1827, 256, %s1829, [#allocation3], 128, 128, 8
    $region73: #{transformer_encoder_forward.1} parent=1 // pred_fallthru
      _
    // Predicated region
    $region74: #{transformer_encoder_forward.1} parent=1 // pred_check
      _
    $region75: #{transformer_encoder_forward.1} parent=1 // pred_check_branch
      %1836 = sbr.rel (0) target = $region77
    $region76: #{transformer_encoder_forward.1} parent=1 // pred_region
      %1838 = dma.done [#allocation3], 256
    $region77: #{transformer_encoder_forward.1} parent=1 // pred_fallthru
      _
    %1839 = vsyncpa [#allocation3], 1

</llo_original>
